<compile_context>
chip_gen: v6e
topology: v6e:2x2x1
jax: 0.10.0
libtpu: 0.0.40
codegen_flags: <defaults>
</compile_context>

<pallas_src>
import functools

import jax
import jax.numpy as jnp
from jax.experimental import pallas as pl
from jax.experimental.pallas import tpu as pltpu


def _decoder_kernel(x0_ref, c0_ref,
                    w_first_ref, b_first_ref,
                    w_comb_ref, b_comb_ref,
                    w_out_ref, b_out_ref,
                    traj_ref, hfin_ref,
                    *, seq_len: int, h_dim: int):
    H = h_dim
    block_b = c0_ref.shape[0]

    c = c0_ref[...]                      # f32 cell state
    w_comb = w_comb_ref[...]             # bf16 (H, 4H)
    w_out = w_out_ref[...]               # bf16 (H, 2)

    # Hoisted bias broadcasts (JAX does not CSE broadcast_in_dim; without this
    # the unrolled time loop would emit seq_len redundant broadcasts).
    b_first_b = jnp.broadcast_to(b_first_ref[...], (block_b, 4 * H))
    b_comb_b = jnp.broadcast_to(b_comb_ref[...], (block_b, 4 * H))
    b_out_b = jnp.broadcast_to(b_out_ref[...], (block_b, 2))

    def lstm_update(gates, c_prev):
        # i/f/o gate columns were pre-scaled by 0.5 on the host, so a SINGLE
        # tanh over the whole (block_b, 4H) vreg yields
        #   sigmoid(x) = 0.5 * (tanh(x/2) + 1)   for i, f, o
        #   tanh(x)                              for g (column left unscaled)
        # -> 2 EUP passes per step (this tanh + tanh(c_new)) instead of 4.
        t = jnp.tanh(gates)
        i_g = 0.5 * (t[:, 0 * H:1 * H] + 1.0)
        f_g = 0.5 * (t[:, 1 * H:2 * H] + 1.0)
        g_g = t[:, 2 * H:3 * H]
        o_g = 0.5 * (t[:, 3 * H:4 * H] + 1.0)
        c_new = f_g * c_prev + i_g * g_g
        h_new = o_g * jnp.tanh(c_new)
        return h_new, c_new

    def store_rel(h_b16, t_idx):
        # rel_t = h_t @ w_out + b_out: off the recurrence critical path
        # (the next step's gates come from w_comb, which already folds this
        # readout + re-embedding). Per-step 2-lane store at a static offset.
        rel = jnp.dot(h_b16, w_out, preferred_element_type=jnp.float32) + b_out_b
        traj_ref[:, 2 * t_idx:2 * t_idx + 2] = rel

    # Step 0: [last_pos_rel | h0] @ [[w_emb @ w_ih], [w_hh]]  (embedding folded).
    gates = jnp.dot(x0_ref[...], w_first_ref[...],
                    preferred_element_type=jnp.float32) + b_first_b
    h, c = lstm_update(gates, c)
    h_b16 = h.astype(jnp.bfloat16)
    store_rel(h_b16, 0)

    # Steps 1..T-1: one (H, 4H) bf16 matmul per step (single MXU pass,
    # RHS exactly 128 lanes). seq_len is small/static -> unrolled.
    for t_idx in range(1, seq_len):
        gates = jnp.dot(h_b16, w_comb,
                        preferred_element_type=jnp.float32) + b_comb_b
        h, c = lstm_update(gates, c)
        h_b16 = h.astype(jnp.bfloat16)
        store_rel(h_b16, t_idx)

    hfin_ref[...] = h


def _pick_block_b(B):
    # Cap at 64 rows (keeps h/c/gates register-resident on all generations)
    # and, for B >= 16, at B//2 so the "parallel" batch grid has >= 2 programs
    # and both v7x TensorCores get work. Must divide B and be a sublane
    # multiple; otherwise fall back to the full batch.
    cap = 64
    if B >= 16:
        cap = min(cap, max(8, B // 2))
    for cand in (64, 32, 16, 8):
        if cand <= cap and B % cand == 0:
            return cand
    return B


def decoder_forward(last_pos_rel, h0, c0, params, *, seq_len, block_b=None):
    B = last_pos_rel.shape[0]
    H = h0.shape[1]
    (w_emb, b_emb, w_ih, w_hh, b_lstm, w_out, b_out) = params

    # Host-side weight fusion is done ONCE at full f32 precision; precision is
    # explicit here so nothing leaks into (or out of) the kernel.
    dot_hi = functools.partial(jnp.dot, precision=jax.lax.Precision.HIGHEST)

    # ---- Host-side algebraic weight fusion ----
    # Step 0: gates0 = [x | h0] @ w_first + b_first
    w_first = jnp.concatenate([dot_hi(w_emb, w_ih), w_hh], axis=0)      # (2+H, 4H)
    b_first = dot_hi(b_emb, w_ih) + b_lstm                              # (1, 4H)
    # Steps t>=1: gates_t = h_{t-1} @ w_comb + b_comb (hidden2pos + embedding folded)
    w_comb = w_hh + dot_hi(dot_hi(w_out, w_emb), w_ih)                  # (H, 4H)
    b_comb = b_lstm + dot_hi(dot_hi(b_out, w_emb) + b_emb, w_ih)        # (1, 4H)

    # Pre-scale i/f/o gate columns by 0.5 (exact, power of two) so the kernel
    # uses a single tanh: sigmoid(x) = 0.5*(tanh(x/2)+1). g column unscaled.
    gate_scale = jnp.concatenate(
        [jnp.full((1, 2 * H), 0.5, jnp.float32),   # i, f
         jnp.ones((1, H), jnp.float32),            # g
         jnp.full((1, H), 0.5, jnp.float32)],      # o
        axis=1)
    w_first = w_first * gate_scale
    b_first = b_first * gate_scale
    w_comb = w_comb * gate_scale
    b_comb = b_comb * gate_scale

    # Fold the first-step inputs into a single concatenated operand.
    x0 = jnp.concatenate([last_pos_rel, h0], axis=1)                    # (B, 2+H)

    # bf16 MXU operands (single-pass matmul on every generation, half the
    # weight DMA/VMEM); biases, accumulation and gate/cell math stay f32.
    x0_k = x0.astype(jnp.bfloat16)
    w_first_k = w_first.astype(jnp.bfloat16)
    w_comb_k = w_comb.astype(jnp.bfloat16)
    w_out_k = w_out.astype(jnp.bfloat16)

    if block_b is None:
        block_b = _pick_block_b(B)
    grid = (B // block_b,)

    kernel = functools.partial(_decoder_kernel, seq_len=seq_len, h_dim=H)

    in_specs = [
        pl.BlockSpec((block_b, x0_k.shape[1]), lambda i: (i, 0)),   # x0
        pl.BlockSpec((block_b, H), lambda i: (i, 0)),               # c0
        pl.BlockSpec(w_first_k.shape, lambda i: (0, 0)),            # w_first (bf16)
        pl.BlockSpec(b_first.shape, lambda i: (0, 0)),              # b_first (f32)
        pl.BlockSpec(w_comb_k.shape, lambda i: (0, 0)),             # w_comb  (bf16)
        pl.BlockSpec(b_comb.shape, lambda i: (0, 0)),               # b_comb  (f32)
        pl.BlockSpec(w_out_k.shape, lambda i: (0, 0)),              # w_out   (bf16)
        pl.BlockSpec(b_out.shape, lambda i: (0, 0)),                # b_out   (f32)
    ]
    out_specs = (
        pl.BlockSpec((block_b, 2 * seq_len), lambda i: (i, 0)),     # packed traj
        pl.BlockSpec((block_b, H), lambda i: (i, 0)),               # final hidden
    )

    traj_packed, h_fin = pl.pallas_call(
        kernel,
        out_shape=(jax.ShapeDtypeStruct((B, 2 * seq_len), jnp.float32),
                   jax.ShapeDtypeStruct((B, H), jnp.float32)),
        grid=grid,
        in_specs=in_specs,
        out_specs=out_specs,
        compiler_params=pltpu.CompilerParams(
            dimension_semantics=("parallel",)),
    )(x0_k, c0, w_first_k, b_first, w_comb_k, b_comb, w_out_k, b_out)

    # (B, 2*seq_len) -> time-major (seq_len, B, 2), as a torch LSTM would emit.
    traj = traj_packed.reshape(B, seq_len, 2).transpose(1, 0, 2)
    return traj, h_fin


def decoder_reference(last_pos_rel, h0, c0, params, *, seq_len):
    # Unfused, full-f32-precision pure-JAX reference (mirrors the PyTorch
    # semantics directly).
    (w_emb, b_emb, w_ih, w_hh, b_lstm, w_out, b_out) = params
    H = h0.shape[1]
    dot_hi = functools.partial(jnp.dot, precision=jax.lax.Precision.HIGHEST)
    h, c = h0, c0
    emb = dot_hi(last_pos_rel, w_emb) + b_emb
    outs = []
    for _ in range(seq_len):
        gates = dot_hi(emb, w_ih) + dot_hi(h, w_hh) + b_lstm
        i_g = jax.nn.sigmoid(gates[:, 0:H])
        f_g = jax.nn.sigmoid(gates[:, H:2 * H])
        g_g = jnp.tanh(gates[:, 2 * H:3 * H])
        o_g = jax.nn.sigmoid(gates[:, 3 * H:4 * H])
        c = f_g * c + i_g * g_g
        h = o_g * jnp.tanh(c)
        rel = dot_hi(h, w_out) + b_out
        outs.append(rel)
        emb = dot_hi(rel, w_emb) + b_emb
    return jnp.stack(outs, axis=0), h


def init_params(key, embedding_dim, h_dim):
    # Deterministic synthetic init (PyTorch-style uniform(-1/sqrt(fan_in), ...)).
    ks = jax.random.split(key, 7)
    bound = 1.0 / jnp.sqrt(h_dim)
    u = lambda k, shape, b: jax.random.uniform(k, shape, jnp.float32, -b, b)
    w_emb = u(ks[0], (2, embedding_dim), 1.0 / jnp.sqrt(2.0))      # Linear(2, E)^T
    b_emb = u(ks[1], (1, embedding_dim), 1.0 / jnp.sqrt(2.0))
    w_ih = u(ks[2], (embedding_dim, 4 * h_dim), bound)             # weight_ih_l0^T
    w_hh = u(ks[3], (h_dim, 4 * h_dim), bound)                     # weight_hh_l0^T
    b_lstm = u(ks[4], (1, 4 * h_dim), bound)                       # bias_ih + bias_hh fused
    w_out = u(ks[5], (h_dim, 2), bound)                            # Linear(H, 2)^T
    b_out = u(ks[6], (1, 2), bound)
    return (w_emb, b_emb, w_ih, w_hh, b_lstm, w_out, b_out)


if __name__ == "__main__":
    SEQ_LEN = 8
    B = 8
    EMB = 16
    H = 32

    key = jax.random.PRNGKey(0)
    k_p, k_x, k_h, k_c = jax.random.split(key, 4)

    params = init_params(k_p, EMB, H)
    last_pos_rel = jax.random.normal(k_x, (B, 2), jnp.float32)
    h0 = jax.random.normal(k_h, (B, H), jnp.float32)
    c0 = jax.random.normal(k_c, (B, H), jnp.float32)

    traj, h_fin = decoder_forward(last_pos_rel, h0, c0, params, seq_len=SEQ_LEN)
    jax.block_until_ready((traj, h_fin))

    traj_ref, h_ref = decoder_reference(last_pos_rel, h0, c0, params,
                                        seq_len=SEQ_LEN)
    jax.block_until_ready((traj_ref, h_ref))

    assert traj.shape == (SEQ_LEN, B, 2) and h_fin.shape == (B, H)
    assert bool(jnp.all(jnp.isfinite(traj))) and bool(jnp.all(jnp.isfinite(h_fin)))
    # Tolerance accounts for single-pass bf16 MXU operands compounding over the
    # 8-step recurrence (typical max |err| ~1e-2 vs the f32-HIGHEST reference);
    # the weight fusion / sigmoid-via-tanh rewrites are exact up to rounding.
    assert float(jnp.max(jnp.abs(traj - traj_ref))) < 5e-2
    assert float(jnp.max(jnp.abs(h_fin - h_ref))) < 5e-2
    print("KERNEL_OK")
</pallas_src>

<mosaic_0001>
module attributes {stable_mosaic.version = 11 : i64} {
  func.func @_decoder_kernel(%arg0: i32, %arg1: memref<8x34xbf16, #tpu.memory_space<vmem>>, %arg2: memref<8x32xf32, #tpu.memory_space<vmem>>, %arg3: memref<34x128xbf16, #tpu.memory_space<vmem>>, %arg4: memref<1x128xf32, #tpu.memory_space<vmem>>, %arg5: memref<32x128xbf16, #tpu.memory_space<vmem>>, %arg6: memref<1x128xf32, #tpu.memory_space<vmem>>, %arg7: memref<32x2xbf16, #tpu.memory_space<vmem>>, %arg8: memref<1x2xf32, #tpu.memory_space<vmem>>, %arg9: memref<8x16xf32, #tpu.memory_space<vmem>>, %arg10: memref<8x32xf32, #tpu.memory_space<vmem>>) attributes {dimension_semantics = [#tpu.dimension_semantics<parallel>], iteration_bounds = array<i64: 1>, scalar_prefetch = 0 : i64, scratch_operands = 0 : i64, tpu.core_type = #tpu.core_type<tc>, window_params = [{transform_indices = @transform_0, window_bounds = array<i64: 8, 34>}, {transform_indices = @transform_1, window_bounds = array<i64: 8, 32>}, {pipeline_mode = #tpu.pipeline_mode<synchronous>, transform_indices = @transform_2, window_bounds = array<i64: 34, 128>}, {pipeline_mode = #tpu.pipeline_mode<synchronous>, transform_indices = @transform_3, window_bounds = array<i64: 1, 128>}, {pipeline_mode = #tpu.pipeline_mode<synchronous>, transform_indices = @transform_4, window_bounds = array<i64: 32, 128>}, {pipeline_mode = #tpu.pipeline_mode<synchronous>, transform_indices = @transform_5, window_bounds = array<i64: 1, 128>}, {pipeline_mode = #tpu.pipeline_mode<synchronous>, transform_indices = @transform_6, window_bounds = array<i64: 32, 2>}, {pipeline_mode = #tpu.pipeline_mode<synchronous>, transform_indices = @transform_7, window_bounds = array<i64: 1, 2>}, {transform_indices = @transform_8, window_bounds = array<i64: 8, 16>}, {transform_indices = @transform_9, window_bounds = array<i64: 8, 32>}]} {
    %c0 = arith.constant 0 : index
    %c0_0 = arith.constant 0 : index
    %0 = vector.load %arg2[%c0, %c0_0] : memref<8x32xf32, #tpu.memory_space<vmem>>, vector<8x32xf32>
    %c0_1 = arith.constant 0 : index
    %c0_2 = arith.constant 0 : index
    %1 = vector.load %arg5[%c0_1, %c0_2] : memref<32x128xbf16, #tpu.memory_space<vmem>>, vector<32x128xbf16>
    %c0_3 = arith.constant 0 : index
    %c0_4 = arith.constant 0 : index
    %2 = vector.load %arg7[%c0_3, %c0_4] : memref<32x2xbf16, #tpu.memory_space<vmem>>, vector<32x2xbf16>
    %c0_5 = arith.constant 0 : index
    %c0_6 = arith.constant 0 : index
    %3 = vector.load %arg4[%c0_5, %c0_6] : memref<1x128xf32, #tpu.memory_space<vmem>>, vector<1x128xf32>
    %4 = vector.shape_cast %3 : vector<1x128xf32> to vector<1x128xf32>
    %5 = vector.broadcast %4 : vector<1x128xf32> to vector<8x128xf32>
    %c0_7 = arith.constant 0 : index
    %c0_8 = arith.constant 0 : index
    %6 = vector.load %arg6[%c0_7, %c0_8] : memref<1x128xf32, #tpu.memory_space<vmem>>, vector<1x128xf32>
    %7 = vector.shape_cast %6 : vector<1x128xf32> to vector<1x128xf32>
    %8 = vector.broadcast %7 : vector<1x128xf32> to vector<8x128xf32>
    %c0_9 = arith.constant 0 : index
    %c0_10 = arith.constant 0 : index
    %9 = vector.load %arg8[%c0_9, %c0_10] : memref<1x2xf32, #tpu.memory_space<vmem>>, vector<1x2xf32>
    %10 = vector.shape_cast %9 : vector<1x2xf32> to vector<1x2xf32>
    %11 = vector.broadcast %10 : vector<1x2xf32> to vector<8x2xf32>
    %c0_11 = arith.constant 0 : index
    %c0_12 = arith.constant 0 : index
    %12 = vector.load %arg1[%c0_11, %c0_12] : memref<8x34xbf16, #tpu.memory_space<vmem>>, vector<8x34xbf16>
    %c0_13 = arith.constant 0 : index
    %c0_14 = arith.constant 0 : index
    %13 = vector.load %arg3[%c0_13, %c0_14] : memref<34x128xbf16, #tpu.memory_space<vmem>>, vector<34x128xbf16>
    %cst = arith.constant dense<0.000000e+00> : vector<8x128xf32>
    %14 = tpu.matmul %12, %13, %cst {dimension_numbers = #tpu.dot_dimension_numbers<[1], [0], [0], [1], [0, 0, 1, 1], [], []>} : vector<8x34xbf16>, vector<34x128xbf16>, vector<8x128xf32> -> vector<8x128xf32>
    %15 = arith.addf %14, %5 : vector<8x128xf32>
    %16 = math.tanh %15 : vector<8x128xf32>
    %17 = vector.extract_strided_slice %16 {offsets = [0, 0], sizes = [8, 32], strides = [1, 1]} : vector<8x128xf32> to vector<8x32xf32>
    %cst_15 = arith.constant 1.000000e+00 : f32
    %18 = vector.broadcast %cst_15 : f32 to vector<8x32xf32>
    %19 = arith.addf %17, %18 : vector<8x32xf32>
    %cst_16 = arith.constant 5.000000e-01 : f32
    %20 = vector.broadcast %cst_16 : f32 to vector<8x32xf32>
    %21 = arith.mulf %20, %19 : vector<8x32xf32>
    %22 = vector.extract_strided_slice %16 {offsets = [0, 32], sizes = [8, 32], strides = [1, 1]} : vector<8x128xf32> to vector<8x32xf32>
    %cst_17 = arith.constant 1.000000e+00 : f32
    %23 = vector.broadcast %cst_17 : f32 to vector<8x32xf32>
    %24 = arith.addf %22, %23 : vector<8x32xf32>
    %cst_18 = arith.constant 5.000000e-01 : f32
    %25 = vector.broadcast %cst_18 : f32 to vector<8x32xf32>
    %26 = arith.mulf %25, %24 : vector<8x32xf32>
    %27 = vector.extract_strided_slice %16 {offsets = [0, 64], sizes = [8, 32], strides = [1, 1]} : vector<8x128xf32> to vector<8x32xf32>
    %28 = vector.extract_strided_slice %16 {offsets = [0, 96], sizes = [8, 32], strides = [1, 1]} : vector<8x128xf32> to vector<8x32xf32>
    %cst_19 = arith.constant 1.000000e+00 : f32
    %29 = vector.broadcast %cst_19 : f32 to vector<8x32xf32>
    %30 = arith.addf %28, %29 : vector<8x32xf32>
    %cst_20 = arith.constant 5.000000e-01 : f32
    %31 = vector.broadcast %cst_20 : f32 to vector<8x32xf32>
    %32 = arith.mulf %31, %30 : vector<8x32xf32>
    %33 = arith.mulf %26, %0 : vector<8x32xf32>
    %34 = arith.mulf %21, %27 : vector<8x32xf32>
    %35 = arith.addf %33, %34 : vector<8x32xf32>
    %36 = math.tanh %35 : vector<8x32xf32>
    %37 = arith.mulf %32, %36 : vector<8x32xf32>
    %38 = arith.truncf %37 : vector<8x32xf32> to vector<8x32xbf16>
    %cst_21 = arith.constant dense<0.000000e+00> : vector<8x2xf32>
    %39 = tpu.matmul %38, %2, %cst_21 {dimension_numbers = #tpu.dot_dimension_numbers<[1], [0], [0], [1], [0, 0, 1, 1], [], []>} : vector<8x32xbf16>, vector<32x2xbf16>, vector<8x2xf32> -> vector<8x2xf32>
    %40 = arith.addf %39, %11 : vector<8x2xf32>
    %c0_22 = arith.constant 0 : index
    %c0_23 = arith.constant 0 : index
    %41 = vector.load %arg9[%c0_22, %c0_23] : memref<8x16xf32, #tpu.memory_space<vmem>>, vector<8x2xf32>
    tpu.vector_store %arg9[%c0_22, %c0_23], %40 {strides = array<i32>} : memref<8x16xf32, #tpu.memory_space<vmem>>, vector<8x2xf32>,
    %cst_24 = arith.constant dense<0.000000e+00> : vector<8x128xf32>
    %42 = tpu.matmul %38, %1, %cst_24 {dimension_numbers = #tpu.dot_dimension_numbers<[1], [0], [0], [1], [0, 0, 1, 1], [], []>} : vector<8x32xbf16>, vector<32x128xbf16>, vector<8x128xf32> -> vector<8x128xf32>
    %43 = arith.addf %42, %8 : vector<8x128xf32>
    %44 = math.tanh %43 : vector<8x128xf32>
    %45 = vector.extract_strided_slice %44 {offsets = [0, 0], sizes = [8, 32], strides = [1, 1]} : vector<8x128xf32> to vector<8x32xf32>
    %cst_25 = arith.constant 1.000000e+00 : f32
    %46 = vector.broadcast %cst_25 : f32 to vector<8x32xf32>
    %47 = arith.addf %45, %46 : vector<8x32xf32>
    %cst_26 = arith.constant 5.000000e-01 : f32
    %48 = vector.broadcast %cst_26 : f32 to vector<8x32xf32>
    %49 = arith.mulf %48, %47 : vector<8x32xf32>
    %50 = vector.extract_strided_slice %44 {offsets = [0, 32], sizes = [8, 32], strides = [1, 1]} : vector<8x128xf32> to vector<8x32xf32>
    %cst_27 = arith.constant 1.000000e+00 : f32
    %51 = vector.broadcast %cst_27 : f32 to vector<8x32xf32>
    %52 = arith.addf %50, %51 : vector<8x32xf32>
    %cst_28 = arith.constant 5.000000e-01 : f32
    %53 = vector.broadcast %cst_28 : f32 to vector<8x32xf32>
    %54 = arith.mulf %53, %52 : vector<8x32xf32>
    %55 = vector.extract_strided_slice %44 {offsets = [0, 64], sizes = [8, 32], strides = [1, 1]} : vector<8x128xf32> to vector<8x32xf32>
    %56 = vector.extract_strided_slice %44 {offsets = [0, 96], sizes = [8, 32], strides = [1, 1]} : vector<8x128xf32> to vector<8x32xf32>
    %cst_29 = arith.constant 1.000000e+00 : f32
    %57 = vector.broadcast %cst_29 : f32 to vector<8x32xf32>
    %58 = arith.addf %56, %57 : vector<8x32xf32>
    %cst_30 = arith.constant 5.000000e-01 : f32
    %59 = vector.broadcast %cst_30 : f32 to vector<8x32xf32>
    %60 = arith.mulf %59, %58 : vector<8x32xf32>
    %61 = arith.mulf %54, %35 : vector<8x32xf32>
    %62 = arith.mulf %49, %55 : vector<8x32xf32>
    %63 = arith.addf %61, %62 : vector<8x32xf32>
    %64 = math.tanh %63 : vector<8x32xf32>
    %65 = arith.mulf %60, %64 : vector<8x32xf32>
    %66 = arith.truncf %65 : vector<8x32xf32> to vector<8x32xbf16>
    %cst_31 = arith.constant dense<0.000000e+00> : vector<8x2xf32>
    %67 = tpu.matmul %66, %2, %cst_31 {dimension_numbers = #tpu.dot_dimension_numbers<[1], [0], [0], [1], [0, 0, 1, 1], [], []>} : vector<8x32xbf16>, vector<32x2xbf16>, vector<8x2xf32> -> vector<8x2xf32>
    %68 = arith.addf %67, %11 : vector<8x2xf32>
    %c0_32 = arith.constant 0 : index
    %c2 = arith.constant 2 : index
    %69 = vector.load %arg9[%c0_32, %c2] : memref<8x16xf32, #tpu.memory_space<vmem>>, vector<8x2xf32>
    tpu.vector_store %arg9[%c0_32, %c2], %68 {strides = array<i32>} : memref<8x16xf32, #tpu.memory_space<vmem>>, vector<8x2xf32>,
    %cst_33 = arith.constant dense<0.000000e+00> : vector<8x128xf32>
    %70 = tpu.matmul %66, %1, %cst_33 {dimension_numbers = #tpu.dot_dimension_numbers<[1], [0], [0], [1], [0, 0, 1, 1], [], []>} : vector<8x32xbf16>, vector<32x128xbf16>, vector<8x128xf32> -> vector<8x128xf32>
    %71 = arith.addf %70, %8 : vector<8x128xf32>
    %72 = math.tanh %71 : vector<8x128xf32>
    %73 = vector.extract_strided_slice %72 {offsets = [0, 0], sizes = [8, 32], strides = [1, 1]} : vector<8x128xf32> to vector<8x32xf32>
    %cst_34 = arith.constant 1.000000e+00 : f32
    %74 = vector.broadcast %cst_34 : f32 to vector<8x32xf32>
    %75 = arith.addf %73, %74 : vector<8x32xf32>
    %cst_35 = arith.constant 5.000000e-01 : f32
    %76 = vector.broadcast %cst_35 : f32 to vector<8x32xf32>
    %77 = arith.mulf %76, %75 : vector<8x32xf32>
    %78 = vector.extract_strided_slice %72 {offsets = [0, 32], sizes = [8, 32], strides = [1, 1]} : vector<8x128xf32> to vector<8x32xf32>
    %cst_36 = arith.constant 1.000000e+00 : f32
    %79 = vector.broadcast %cst_36 : f32 to vector<8x32xf32>
    %80 = arith.addf %78, %79 : vector<8x32xf32>
    %cst_37 = arith.constant 5.000000e-01 : f32
    %81 = vector.broadcast %cst_37 : f32 to vector<8x32xf32>
    %82 = arith.mulf %81, %80 : vector<8x32xf32>
    %83 = vector.extract_strided_slice %72 {offsets = [0, 64], sizes = [8, 32], strides = [1, 1]} : vector<8x128xf32> to vector<8x32xf32>
    %84 = vector.extract_strided_slice %72 {offsets = [0, 96], sizes = [8, 32], strides = [1, 1]} : vector<8x128xf32> to vector<8x32xf32>
    %cst_38 = arith.constant 1.000000e+00 : f32
    %85 = vector.broadcast %cst_38 : f32 to vector<8x32xf32>
    %86 = arith.addf %84, %85 : vector<8x32xf32>
    %cst_39 = arith.constant 5.000000e-01 : f32
    %87 = vector.broadcast %cst_39 : f32 to vector<8x32xf32>
    %88 = arith.mulf %87, %86 : vector<8x32xf32>
    %89 = arith.mulf %82, %63 : vector<8x32xf32>
    %90 = arith.mulf %77, %83 : vector<8x32xf32>
    %91 = arith.addf %89, %90 : vector<8x32xf32>
    %92 = math.tanh %91 : vector<8x32xf32>
    %93 = arith.mulf %88, %92 : vector<8x32xf32>
    %94 = arith.truncf %93 : vector<8x32xf32> to vector<8x32xbf16>
    %cst_40 = arith.constant dense<0.000000e+00> : vector<8x2xf32>
    %95 = tpu.matmul %94, %2, %cst_40 {dimension_numbers = #tpu.dot_dimension_numbers<[1], [0], [0], [1], [0, 0, 1, 1], [], []>} : vector<8x32xbf16>, vector<32x2xbf16>, vector<8x2xf32> -> vector<8x2xf32>
    %96 = arith.addf %95, %11 : vector<8x2xf32>
    %c0_41 = arith.constant 0 : index
    %c4 = arith.constant 4 : index
    %97 = vector.load %arg9[%c0_41, %c4] : memref<8x16xf32, #tpu.memory_space<vmem>>, vector<8x2xf32>
    tpu.vector_store %arg9[%c0_41, %c4], %96 {strides = array<i32>} : memref<8x16xf32, #tpu.memory_space<vmem>>, vector<8x2xf32>,
    %cst_42 = arith.constant dense<0.000000e+00> : vector<8x128xf32>
    %98 = tpu.matmul %94, %1, %cst_42 {dimension_numbers = #tpu.dot_dimension_numbers<[1], [0], [0], [1], [0, 0, 1, 1], [], []>} : vector<8x32xbf16>, vector<32x128xbf16>, vector<8x128xf32> -> vector<8x128xf32>
    %99 = arith.addf %98, %8 : vector<8x128xf32>
    %100 = math.tanh %99 : vector<8x128xf32>
    %101 = vector.extract_strided_slice %100 {offsets = [0, 0], sizes = [8, 32], strides = [1, 1]} : vector<8x128xf32> to vector<8x32xf32>
    %cst_43 = arith.constant 1.000000e+00 : f32
    %102 = vector.broadcast %cst_43 : f32 to vector<8x32xf32>
    %103 = arith.addf %101, %102 : vector<8x32xf32>
    %cst_44 = arith.constant 5.000000e-01 : f32
    %104 = vector.broadcast %cst_44 : f32 to vector<8x32xf32>
    %105 = arith.mulf %104, %103 : vector<8x32xf32>
    %106 = vector.extract_strided_slice %100 {offsets = [0, 32], sizes = [8, 32], strides = [1, 1]} : vector<8x128xf32> to vector<8x32xf32>
    %cst_45 = arith.constant 1.000000e+00 : f32
    %107 = vector.broadcast %cst_45 : f32 to vector<8x32xf32>
    %108 = arith.addf %106, %107 : vector<8x32xf32>
    %cst_46 = arith.constant 5.000000e-01 : f32
    %109 = vector.broadcast %cst_46 : f32 to vector<8x32xf32>
    %110 = arith.mulf %109, %108 : vector<8x32xf32>
    %111 = vector.extract_strided_slice %100 {offsets = [0, 64], sizes = [8, 32], strides = [1, 1]} : vector<8x128xf32> to vector<8x32xf32>
    %112 = vector.extract_strided_slice %100 {offsets = [0, 96], sizes = [8, 32], strides = [1, 1]} : vector<8x128xf32> to vector<8x32xf32>
    %cst_47 = arith.constant 1.000000e+00 : f32
    %113 = vector.broadcast %cst_47 : f32 to vector<8x32xf32>
    %114 = arith.addf %112, %113 : vector<8x32xf32>
    %cst_48 = arith.constant 5.000000e-01 : f32
    %115 = vector.broadcast %cst_48 : f32 to vector<8x32xf32>
    %116 = arith.mulf %115, %114 : vector<8x32xf32>
    %117 = arith.mulf %110, %91 : vector<8x32xf32>
    %118 = arith.mulf %105, %111 : vector<8x32xf32>
    %119 = arith.addf %117, %118 : vector<8x32xf32>
    %120 = math.tanh %119 : vector<8x32xf32>
    %121 = arith.mulf %116, %120 : vector<8x32xf32>
    %122 = arith.truncf %121 : vector<8x32xf32> to vector<8x32xbf16>
    %cst_49 = arith.constant dense<0.000000e+00> : vector<8x2xf32>
    %123 = tpu.matmul %122, %2, %cst_49 {dimension_numbers = #tpu.dot_dimension_numbers<[1], [0], [0], [1], [0, 0, 1, 1], [], []>} : vector<8x32xbf16>, vector<32x2xbf16>, vector<8x2xf32> -> vector<8x2xf32>
    %124 = arith.addf %123, %11 : vector<8x2xf32>
    %c0_50 = arith.constant 0 : index
    %c6 = arith.constant 6 : index
    %125 = vector.load %arg9[%c0_50, %c6] : memref<8x16xf32, #tpu.memory_space<vmem>>, vector<8x2xf32>
    tpu.vector_store %arg9[%c0_50, %c6], %124 {strides = array<i32>} : memref<8x16xf32, #tpu.memory_space<vmem>>, vector<8x2xf32>,
    %cst_51 = arith.constant dense<0.000000e+00> : vector<8x128xf32>
    %126 = tpu.matmul %122, %1, %cst_51 {dimension_numbers = #tpu.dot_dimension_numbers<[1], [0], [0], [1], [0, 0, 1, 1], [], []>} : vector<8x32xbf16>, vector<32x128xbf16>, vector<8x128xf32> -> vector<8x128xf32>
    %127 = arith.addf %126, %8 : vector<8x128xf32>
    %128 = math.tanh %127 : vector<8x128xf32>
    %129 = vector.extract_strided_slice %128 {offsets = [0, 0], sizes = [8, 32], strides = [1, 1]} : vector<8x128xf32> to vector<8x32xf32>
    %cst_52 = arith.constant 1.000000e+00 : f32
    %130 = vector.broadcast %cst_52 : f32 to vector<8x32xf32>
    %131 = arith.addf %129, %130 : vector<8x32xf32>
    %cst_53 = arith.constant 5.000000e-01 : f32
    %132 = vector.broadcast %cst_53 : f32 to vector<8x32xf32>
    %133 = arith.mulf %132, %131 : vector<8x32xf32>
    %134 = vector.extract_strided_slice %128 {offsets = [0, 32], sizes = [8, 32], strides = [1, 1]} : vector<8x128xf32> to vector<8x32xf32>
    %cst_54 = arith.constant 1.000000e+00 : f32
    %135 = vector.broadcast %cst_54 : f32 to vector<8x32xf32>
    %136 = arith.addf %134, %135 : vector<8x32xf32>
    %cst_55 = arith.constant 5.000000e-01 : f32
    %137 = vector.broadcast %cst_55 : f32 to vector<8x32xf32>
    %138 = arith.mulf %137, %136 : vector<8x32xf32>
    %139 = vector.extract_strided_slice %128 {offsets = [0, 64], sizes = [8, 32], strides = [1, 1]} : vector<8x128xf32> to vector<8x32xf32>
    %140 = vector.extract_strided_slice %128 {offsets = [0, 96], sizes = [8, 32], strides = [1, 1]} : vector<8x128xf32> to vector<8x32xf32>
    %cst_56 = arith.constant 1.000000e+00 : f32
    %141 = vector.broadcast %cst_56 : f32 to vector<8x32xf32>
    %142 = arith.addf %140, %141 : vector<8x32xf32>
    %cst_57 = arith.constant 5.000000e-01 : f32
    %143 = vector.broadcast %cst_57 : f32 to vector<8x32xf32>
    %144 = arith.mulf %143, %142 : vector<8x32xf32>
    %145 = arith.mulf %138, %119 : vector<8x32xf32>
    %146 = arith.mulf %133, %139 : vector<8x32xf32>
    %147 = arith.addf %145, %146 : vector<8x32xf32>
    %148 = math.tanh %147 : vector<8x32xf32>
    %149 = arith.mulf %144, %148 : vector<8x32xf32>
    %150 = arith.truncf %149 : vector<8x32xf32> to vector<8x32xbf16>
    %cst_58 = arith.constant dense<0.000000e+00> : vector<8x2xf32>
    %151 = tpu.matmul %150, %2, %cst_58 {dimension_numbers = #tpu.dot_dimension_numbers<[1], [0], [0], [1], [0, 0, 1, 1], [], []>} : vector<8x32xbf16>, vector<32x2xbf16>, vector<8x2xf32> -> vector<8x2xf32>
    %152 = arith.addf %151, %11 : vector<8x2xf32>
    %c0_59 = arith.constant 0 : index
    %c8 = arith.constant 8 : index
    %153 = vector.load %arg9[%c0_59, %c8] : memref<8x16xf32, #tpu.memory_space<vmem>>, vector<8x2xf32>
    tpu.vector_store %arg9[%c0_59, %c8], %152 {strides = array<i32>} : memref<8x16xf32, #tpu.memory_space<vmem>>, vector<8x2xf32>,
    %cst_60 = arith.constant dense<0.000000e+00> : vector<8x128xf32>
    %154 = tpu.matmul %150, %1, %cst_60 {dimension_numbers = #tpu.dot_dimension_numbers<[1], [0], [0], [1], [0, 0, 1, 1], [], []>} : vector<8x32xbf16>, vector<32x128xbf16>, vector<8x128xf32> -> vector<8x128xf32>
    %155 = arith.addf %154, %8 : vector<8x128xf32>
    %156 = math.tanh %155 : vector<8x128xf32>
    %157 = vector.extract_strided_slice %156 {offsets = [0, 0], sizes = [8, 32], strides = [1, 1]} : vector<8x128xf32> to vector<8x32xf32>
    %cst_61 = arith.constant 1.000000e+00 : f32
    %158 = vector.broadcast %cst_61 : f32 to vector<8x32xf32>
    %159 = arith.addf %157, %158 : vector<8x32xf32>
    %cst_62 = arith.constant 5.000000e-01 : f32
    %160 = vector.broadcast %cst_62 : f32 to vector<8x32xf32>
    %161 = arith.mulf %160, %159 : vector<8x32xf32>
    %162 = vector.extract_strided_slice %156 {offsets = [0, 32], sizes = [8, 32], strides = [1, 1]} : vector<8x128xf32> to vector<8x32xf32>
    %cst_63 = arith.constant 1.000000e+00 : f32
    %163 = vector.broadcast %cst_63 : f32 to vector<8x32xf32>
    %164 = arith.addf %162, %163 : vector<8x32xf32>
    %cst_64 = arith.constant 5.000000e-01 : f32
    %165 = vector.broadcast %cst_64 : f32 to vector<8x32xf32>
    %166 = arith.mulf %165, %164 : vector<8x32xf32>
    %167 = vector.extract_strided_slice %156 {offsets = [0, 64], sizes = [8, 32], strides = [1, 1]} : vector<8x128xf32> to vector<8x32xf32>
    %168 = vector.extract_strided_slice %156 {offsets = [0, 96], sizes = [8, 32], strides = [1, 1]} : vector<8x128xf32> to vector<8x32xf32>
    %cst_65 = arith.constant 1.000000e+00 : f32
    %169 = vector.broadcast %cst_65 : f32 to vector<8x32xf32>
    %170 = arith.addf %168, %169 : vector<8x32xf32>
    %cst_66 = arith.constant 5.000000e-01 : f32
    %171 = vector.broadcast %cst_66 : f32 to vector<8x32xf32>
    %172 = arith.mulf %171, %170 : vector<8x32xf32>
    %173 = arith.mulf %166, %147 : vector<8x32xf32>
    %174 = arith.mulf %161, %167 : vector<8x32xf32>
    %175 = arith.addf %173, %174 : vector<8x32xf32>
    %176 = math.tanh %175 : vector<8x32xf32>
    %177 = arith.mulf %172, %176 : vector<8x32xf32>
    %178 = arith.truncf %177 : vector<8x32xf32> to vector<8x32xbf16>
    %cst_67 = arith.constant dense<0.000000e+00> : vector<8x2xf32>
    %179 = tpu.matmul %178, %2, %cst_67 {dimension_numbers = #tpu.dot_dimension_numbers<[1], [0], [0], [1], [0, 0, 1, 1], [], []>} : vector<8x32xbf16>, vector<32x2xbf16>, vector<8x2xf32> -> vector<8x2xf32>
    %180 = arith.addf %179, %11 : vector<8x2xf32>
    %c0_68 = arith.constant 0 : index
    %c10 = arith.constant 10 : index
    %181 = vector.load %arg9[%c0_68, %c10] : memref<8x16xf32, #tpu.memory_space<vmem>>, vector<8x2xf32>
    tpu.vector_store %arg9[%c0_68, %c10], %180 {strides = array<i32>} : memref<8x16xf32, #tpu.memory_space<vmem>>, vector<8x2xf32>,
    %cst_69 = arith.constant dense<0.000000e+00> : vector<8x128xf32>
    %182 = tpu.matmul %178, %1, %cst_69 {dimension_numbers = #tpu.dot_dimension_numbers<[1], [0], [0], [1], [0, 0, 1, 1], [], []>} : vector<8x32xbf16>, vector<32x128xbf16>, vector<8x128xf32> -> vector<8x128xf32>
    %183 = arith.addf %182, %8 : vector<8x128xf32>
    %184 = math.tanh %183 : vector<8x128xf32>
    %185 = vector.extract_strided_slice %184 {offsets = [0, 0], sizes = [8, 32], strides = [1, 1]} : vector<8x128xf32> to vector<8x32xf32>
    %cst_70 = arith.constant 1.000000e+00 : f32
    %186 = vector.broadcast %cst_70 : f32 to vector<8x32xf32>
    %187 = arith.addf %185, %186 : vector<8x32xf32>
    %cst_71 = arith.constant 5.000000e-01 : f32
    %188 = vector.broadcast %cst_71 : f32 to vector<8x32xf32>
    %189 = arith.mulf %188, %187 : vector<8x32xf32>
    %190 = vector.extract_strided_slice %184 {offsets = [0, 32], sizes = [8, 32], strides = [1, 1]} : vector<8x128xf32> to vector<8x32xf32>
    %cst_72 = arith.constant 1.000000e+00 : f32
    %191 = vector.broadcast %cst_72 : f32 to vector<8x32xf32>
    %192 = arith.addf %190, %191 : vector<8x32xf32>
    %cst_73 = arith.constant 5.000000e-01 : f32
    %193 = vector.broadcast %cst_73 : f32 to vector<8x32xf32>
    %194 = arith.mulf %193, %192 : vector<8x32xf32>
    %195 = vector.extract_strided_slice %184 {offsets = [0, 64], sizes = [8, 32], strides = [1, 1]} : vector<8x128xf32> to vector<8x32xf32>
    %196 = vector.extract_strided_slice %184 {offsets = [0, 96], sizes = [8, 32], strides = [1, 1]} : vector<8x128xf32> to vector<8x32xf32>
    %cst_74 = arith.constant 1.000000e+00 : f32
    %197 = vector.broadcast %cst_74 : f32 to vector<8x32xf32>
    %198 = arith.addf %196, %197 : vector<8x32xf32>
    %cst_75 = arith.constant 5.000000e-01 : f32
    %199 = vector.broadcast %cst_75 : f32 to vector<8x32xf32>
    %200 = arith.mulf %199, %198 : vector<8x32xf32>
    %201 = arith.mulf %194, %175 : vector<8x32xf32>
    %202 = arith.mulf %189, %195 : vector<8x32xf32>
    %203 = arith.addf %201, %202 : vector<8x32xf32>
    %204 = math.tanh %203 : vector<8x32xf32>
    %205 = arith.mulf %200, %204 : vector<8x32xf32>
    %206 = arith.truncf %205 : vector<8x32xf32> to vector<8x32xbf16>
    %cst_76 = arith.constant dense<0.000000e+00> : vector<8x2xf32>
    %207 = tpu.matmul %206, %2, %cst_76 {dimension_numbers = #tpu.dot_dimension_numbers<[1], [0], [0], [1], [0, 0, 1, 1], [], []>} : vector<8x32xbf16>, vector<32x2xbf16>, vector<8x2xf32> -> vector<8x2xf32>
    %208 = arith.addf %207, %11 : vector<8x2xf32>
    %c0_77 = arith.constant 0 : index
    %c12 = arith.constant 12 : index
    %209 = vector.load %arg9[%c0_77, %c12] : memref<8x16xf32, #tpu.memory_space<vmem>>, vector<8x2xf32>
    tpu.vector_store %arg9[%c0_77, %c12], %208 {strides = array<i32>} : memref<8x16xf32, #tpu.memory_space<vmem>>, vector<8x2xf32>,
    %cst_78 = arith.constant dense<0.000000e+00> : vector<8x128xf32>
    %210 = tpu.matmul %206, %1, %cst_78 {dimension_numbers = #tpu.dot_dimension_numbers<[1], [0], [0], [1], [0, 0, 1, 1], [], []>} : vector<8x32xbf16>, vector<32x128xbf16>, vector<8x128xf32> -> vector<8x128xf32>
    %211 = arith.addf %210, %8 : vector<8x128xf32>
    %212 = math.tanh %211 : vector<8x128xf32>
    %213 = vector.extract_strided_slice %212 {offsets = [0, 0], sizes = [8, 32], strides = [1, 1]} : vector<8x128xf32> to vector<8x32xf32>
    %cst_79 = arith.constant 1.000000e+00 : f32
    %214 = vector.broadcast %cst_79 : f32 to vector<8x32xf32>
    %215 = arith.addf %213, %214 : vector<8x32xf32>
    %cst_80 = arith.constant 5.000000e-01 : f32
    %216 = vector.broadcast %cst_80 : f32 to vector<8x32xf32>
    %217 = arith.mulf %216, %215 : vector<8x32xf32>
    %218 = vector.extract_strided_slice %212 {offsets = [0, 32], sizes = [8, 32], strides = [1, 1]} : vector<8x128xf32> to vector<8x32xf32>
    %cst_81 = arith.constant 1.000000e+00 : f32
    %219 = vector.broadcast %cst_81 : f32 to vector<8x32xf32>
    %220 = arith.addf %218, %219 : vector<8x32xf32>
    %cst_82 = arith.constant 5.000000e-01 : f32
    %221 = vector.broadcast %cst_82 : f32 to vector<8x32xf32>
    %222 = arith.mulf %221, %220 : vector<8x32xf32>
    %223 = vector.extract_strided_slice %212 {offsets = [0, 64], sizes = [8, 32], strides = [1, 1]} : vector<8x128xf32> to vector<8x32xf32>
    %224 = vector.extract_strided_slice %212 {offsets = [0, 96], sizes = [8, 32], strides = [1, 1]} : vector<8x128xf32> to vector<8x32xf32>
    %cst_83 = arith.constant 1.000000e+00 : f32
    %225 = vector.broadcast %cst_83 : f32 to vector<8x32xf32>
    %226 = arith.addf %224, %225 : vector<8x32xf32>
    %cst_84 = arith.constant 5.000000e-01 : f32
    %227 = vector.broadcast %cst_84 : f32 to vector<8x32xf32>
    %228 = arith.mulf %227, %226 : vector<8x32xf32>
    %229 = arith.mulf %222, %203 : vector<8x32xf32>
    %230 = arith.mulf %217, %223 : vector<8x32xf32>
    %231 = arith.addf %229, %230 : vector<8x32xf32>
    %232 = math.tanh %231 : vector<8x32xf32>
    %233 = arith.mulf %228, %232 : vector<8x32xf32>
    %234 = arith.truncf %233 : vector<8x32xf32> to vector<8x32xbf16>
    %cst_85 = arith.constant dense<0.000000e+00> : vector<8x2xf32>
    %235 = tpu.matmul %234, %2, %cst_85 {dimension_numbers = #tpu.dot_dimension_numbers<[1], [0], [0], [1], [0, 0, 1, 1], [], []>} : vector<8x32xbf16>, vector<32x2xbf16>, vector<8x2xf32> -> vector<8x2xf32>
    %236 = arith.addf %235, %11 : vector<8x2xf32>
    %c0_86 = arith.constant 0 : index
    %c14 = arith.constant 14 : index
    %237 = vector.load %arg9[%c0_86, %c14] : memref<8x16xf32, #tpu.memory_space<vmem>>, vector<8x2xf32>
    tpu.vector_store %arg9[%c0_86, %c14], %236 {strides = array<i32>} : memref<8x16xf32, #tpu.memory_space<vmem>>, vector<8x2xf32>,
    %c0_87 = arith.constant 0 : index
    %c0_88 = arith.constant 0 : index
    %238 = vector.load %arg10[%c0_87, %c0_88] : memref<8x32xf32, #tpu.memory_space<vmem>>, vector<8x32xf32>
    tpu.vector_store %arg10[%c0_87, %c0_88], %233 {strides = array<i32>} : memref<8x32xf32, #tpu.memory_space<vmem>>, vector<8x32xf32>,
    return
  }
  func.func @transform_0(%arg0: i32) -> (i32, i32) {
    %c0_i32 = arith.constant 0 : i32
    %c0_i32_0 = arith.constant 0 : i32
    return %arg0, %c0_i32 : i32, i32
  }
  func.func @transform_1(%arg0: i32) -> (i32, i32) {
    %c0_i32 = arith.constant 0 : i32
    %c0_i32_0 = arith.constant 0 : i32
    return %arg0, %c0_i32 : i32, i32
  }
  func.func @transform_2(%arg0: i32) -> (i32, i32) {
    %c0_i32 = arith.constant 0 : i32
    %c0_i32_0 = arith.constant 0 : i32
    %c0_i32_1 = arith.constant 0 : i32
    return %c0_i32, %c0_i32_0 : i32, i32
  }
  func.func @transform_3(%arg0: i32) -> (i32, i32) {
    %c0_i32 = arith.constant 0 : i32
    %c0_i32_0 = arith.constant 0 : i32
    %c0_i32_1 = arith.constant 0 : i32
    return %c0_i32, %c0_i32_0 : i32, i32
  }
  func.func @transform_4(%arg0: i32) -> (i32, i32) {
    %c0_i32 = arith.constant 0 : i32
    %c0_i32_0 = arith.constant 0 : i32
    %c0_i32_1 = arith.constant 0 : i32
    return %c0_i32, %c0_i32_0 : i32, i32
  }
  func.func @transform_5(%arg0: i32) -> (i32, i32) {
    %c0_i32 = arith.constant 0 : i32
    %c0_i32_0 = arith.constant 0 : i32
    %c0_i32_1 = arith.constant 0 : i32
    return %c0_i32, %c0_i32_0 : i32, i32
  }
  func.func @transform_6(%arg0: i32) -> (i32, i32) {
    %c0_i32 = arith.constant 0 : i32
    %c0_i32_0 = arith.constant 0 : i32
    %c0_i32_1 = arith.constant 0 : i32
    return %c0_i32, %c0_i32_0 : i32, i32
  }
  func.func @transform_7(%arg0: i32) -> (i32, i32) {
    %c0_i32 = arith.constant 0 : i32
    %c0_i32_0 = arith.constant 0 : i32
    %c0_i32_1 = arith.constant 0 : i32
    return %c0_i32, %c0_i32_0 : i32, i32
  }
  func.func @transform_8(%arg0: i32) -> (i32, i32) {
    %c0_i32 = arith.constant 0 : i32
    %c0_i32_0 = arith.constant 0 : i32
    return %arg0, %c0_i32 : i32, i32
  }
  func.func @transform_9(%arg0: i32) -> (i32, i32) {
    %c0_i32 = arith.constant 0 : i32
    %c0_i32_0 = arith.constant 0 : i32
    return %arg0, %c0_i32 : i32, i32
  }
}

</mosaic_0001>

<llo_original>
// kernel: tpu_custom_call.1
$region0: #{tpu_custom_call.1}
  #allocation0 [shape = 'u32[]', space=smem, size = 0x4, offset = 0x4, fixed_abs, tag = 'smem constant byte address 0x4 - core index']
  #allocation1 [shape = 'u32[144,128]{1,0:T(1,128)}', space=vmem, size = 0x12000, scoped, tag = 'internal scratch']
  %s0 = inlined_call_operand.hbm [shape: bf16[8,34], index: 0, kind: input, shape index: {}]
  %s1 = inlined_call_operand.hbm [shape: f32[8,32], index: 1, kind: input, shape index: {}]
  %s2 = inlined_call_operand.vmem [shape: bf16[34,128], index: 2, kind: input, shape index: {}]
  %s3 = inlined_call_operand.vmem [shape: f32[1,128], index: 3, kind: input, shape index: {}]
  %s4 = inlined_call_operand.hbm [shape: bf16[32,128], index: 4, kind: input, shape index: {}]
  %s5 = inlined_call_operand.vmem [shape: f32[1,128], index: 5, kind: input, shape index: {}]
  %s6 = inlined_call_operand.vmem [shape: bf16[32,2], index: 6, kind: input, shape index: {}]
  %s7 = inlined_call_operand.vmem [shape: f32[1,2], index: 7, kind: input, shape index: {}]
  %s8 = inlined_call_operand.hbm [shape: f32[8,16], index: 8, kind: output, shape index: {0}]
  %s9 = inlined_call_operand.hbm [shape: f32[8,32], index: 9, kind: output, shape index: {1}]
  %10 = xla_tuple %s8, %s9
  %s11 = sld [smem:[#allocation0]]
  $region62: #{tpu_custom_call.1} parent=0
    _
  %s13 = ssub.s32 1, %s11
  %s14 = scalar_select 0, %s13, %s11
  $region1: #{tpu_custom_call.1} parent=0
    #allocation2 [shape = 'u8[2048]{0}', space=vmem, size = 0x800, scoped, tag = 'input window, operand 0, single buffered']
    #allocation3 [shape = 's32[1]{0}', space=sflag, size = 0x4, scoped, tag = 'scoped memory for tpu_custom_call.1']
    #allocation4 [shape = 's32[1]{0}', space=sflag, size = 0x4, scoped, tag = 'scoped memory for tpu_custom_call.1']
    #allocation5 [shape = 'u8[4096]{0}', space=vmem, size = 0x1000, scoped, tag = 'input window, operand 1, single buffered']
    #allocation6 [shape = 's32[1]{0}', space=sflag, size = 0x4, scoped, tag = 'scoped memory for tpu_custom_call.1']
    #allocation7 [shape = 'u8[8192]{0}', space=vmem, size = 0x2000, scoped, tag = 'input window, operand 4, single buffered']
    #allocation8 [shape = 'u8[4096]{0}', space=vmem, size = 0x1000, scoped, tag = 'output window, operand 0, single buffered']
    #allocation9 [shape = 'u8[4096]{0}', space=vmem, size = 0x1000, scoped, tag = 'output window, operand 1, single buffered']
    #allocation10 [shape = 's32[1]{0}', space=sflag, size = 0x4, scoped, tag = 'scoped memory for tpu_custom_call.1']
    %15 = vsyncpa [#allocation3], 0
    %16 = vsyncpa [#allocation6], 0
    %17 = vsyncpa [#allocation4], 0
    %18 = vsyncpa [#allocation10], 0
    // Predicated region
    $region2: #{tpu_custom_call.1} parent=1 // pred_check
      _
    $region3: #{tpu_custom_call.1} parent=1 // pred_check_branch
      %20 = sbr.rel (0) target = $region5
    $region4: #{tpu_custom_call.1} parent=1 // pred_region
      %s22 = ssub.s32 64, 64
      %23 = vsyncadd [#allocation3], %s22
      %s25 = sshll.u32 [#allocation2], 4
      %s26 = int_to_ptr.vmem [resolvable:$true] %s25
      %28 = dma.hbm_to_vmem [thread:$0]  %s0, 64, %s26, [#allocation3]
    $region5: #{tpu_custom_call.1} parent=1 // pred_fallthru
      _
    // Predicated region
    $region6: #{tpu_custom_call.1} parent=1 // pred_check
      _
    $region7: #{tpu_custom_call.1} parent=1 // pred_check_branch
      %30 = sbr.rel (0) target = $region9
    $region8: #{tpu_custom_call.1} parent=1 // pred_region
      %s32 = ssub.s32 128, 128
      %33 = vsyncadd [#allocation6], %s32
      %s35 = sshll.u32 [#allocation5], 4
      %s36 = int_to_ptr.vmem [resolvable:$true] %s35
      %38 = dma.hbm_to_vmem [thread:$0]  %s1, 128, %s36, [#allocation6]
    $region9: #{tpu_custom_call.1} parent=1 // pred_fallthru
      _
    // Predicated region
    $region10: #{tpu_custom_call.1} parent=1 // pred_check
      _
    $region11: #{tpu_custom_call.1} parent=1 // pred_check_branch
      %40 = sbr.rel (0) target = $region13
    $region12: #{tpu_custom_call.1} parent=1 // pred_region
      _
    $region13: #{tpu_custom_call.1} parent=1 // pred_fallthru
      _
    // Predicated region
    $region14: #{tpu_custom_call.1} parent=1 // pred_check
      _
    $region15: #{tpu_custom_call.1} parent=1 // pred_check_branch
      %42 = sbr.rel (0) target = $region17
    $region16: #{tpu_custom_call.1} parent=1 // pred_region
      _
    $region17: #{tpu_custom_call.1} parent=1 // pred_fallthru
      _
    // Predicated region
    $region18: #{tpu_custom_call.1} parent=1 // pred_check
      _
    $region19: #{tpu_custom_call.1} parent=1 // pred_check_branch
      %44 = sbr.rel (0) target = $region21
    $region20: #{tpu_custom_call.1} parent=1 // pred_region
      %s46 = ssub.s32 256, 256
      %47 = vsyncadd [#allocation6], %s46
      %s48 = sshll.u32 [#allocation7], 4
      %s49 = int_to_ptr.vmem [resolvable:$true] %s48
      %54 = dma.hbm_to_vmem [thread:$0]  %s4, 256, %s49, [#allocation6], 64, 64, 4
    $region21: #{tpu_custom_call.1} parent=1 // pred_fallthru
      _
    // Predicated region
    $region22: #{tpu_custom_call.1} parent=1 // pred_check
      _
    $region23: #{tpu_custom_call.1} parent=1 // pred_check_branch
      %56 = sbr.rel (0) target = $region25
    $region24: #{tpu_custom_call.1} parent=1 // pred_region
      _
    $region25: #{tpu_custom_call.1} parent=1 // pred_fallthru
      _
    // Predicated region
    $region26: #{tpu_custom_call.1} parent=1 // pred_check
      _
    $region27: #{tpu_custom_call.1} parent=1 // pred_check_branch
      %58 = sbr.rel (0) target = $region29
    $region28: #{tpu_custom_call.1} parent=1 // pred_region
      _
    $region29: #{tpu_custom_call.1} parent=1 // pred_fallthru
      _
    // Predicated region
    $region30: #{tpu_custom_call.1} parent=1 // pred_check
      _
    $region31: #{tpu_custom_call.1} parent=1 // pred_check_branch
      %60 = sbr.rel (0) target = $region33
    $region32: #{tpu_custom_call.1} parent=1 // pred_region
      _
    $region33: #{tpu_custom_call.1} parent=1 // pred_fallthru
      _
    // Predicated region
    $region34: #{tpu_custom_call.1} parent=1 // pred_check
      _
    $region35: #{tpu_custom_call.1} parent=1 // pred_check_branch
      %62 = sbr.rel (0) target = $region37
    $region36: #{tpu_custom_call.1} parent=1 // pred_region
      %63 = dma.done [#allocation3], 64
    $region37: #{tpu_custom_call.1} parent=1 // pred_fallthru
      _
    // Predicated region
    $region38: #{tpu_custom_call.1} parent=1 // pred_check
      _
    $region39: #{tpu_custom_call.1} parent=1 // pred_check_branch
      %65 = sbr.rel (0) target = $region41
    $region40: #{tpu_custom_call.1} parent=1 // pred_region
      %66 = dma.done [#allocation6], 128
    $region41: #{tpu_custom_call.1} parent=1 // pred_fallthru
      _
    // Predicated region
    $region42: #{tpu_custom_call.1} parent=1 // pred_check
      _
    $region43: #{tpu_custom_call.1} parent=1 // pred_check_branch
      %68 = sbr.rel (0) target = $region45
    $region44: #{tpu_custom_call.1} parent=1 // pred_region
      %69 = dma.done [#allocation6], 256
    $region45: #{tpu_custom_call.1} parent=1 // pred_fallthru
      _
    %v71 = vld [vmem:[#allocation5] sm:$0xff]
    %v72 = vld [vmem:[#allocation7] sm:$0xf]
    %v73 = vld [vmem:[#allocation7 + $0x4] sm:$0xf]
    %v74 = vld [vmem:[#allocation7 + $0x8] sm:$0xf]
    %v75 = vld [vmem:[#allocation7 + $0xc] sm:$0xf]
    %v76 = vld [vmem:[%s6] sm:$0xf]
    %v77 = vld [vmem:[%s6 + $0x4] sm:$0xf]
    %v78 = vld [vmem:[%s6 + $0x8] sm:$0xf]
    %v79 = vld [vmem:[%s6 + $0xc] sm:$0xf]
    %v80 = vld [vmem:[%s3] sm:$0x1]
    %v82 = vlaneseq
    %v83 = vshrl.u32 %v82, 7
    %v84 = vsub.s32 0, %v83
    %v85 = vrot.slane %v80, %v84
    %v87 = vld [vmem:[%s5] sm:$0x1]
    %v89 = vlaneseq
    %v90 = vshrl.u32 %v89, 7
    %v91 = vsub.s32 0, %v90
    %v92 = vrot.slane %v87, %v91
    %v94 = vld [vmem:[%s7] sm:$0x1]
    %v96 = vlaneseq
    %v97 = vshrl.u32 %v96, 7
    %v98 = vsub.s32 0, %v97
    %v99 = vrot.slane %v94, %v98
    %v101 = vld [vmem:[#allocation2] sm:$0xf]
    %v102 = vld [vmem:[%s2] sm:$0xf]
    %v103 = vld [vmem:[%s2 + $0x4] sm:$0xf]
    %v104 = vld [vmem:[%s2 + $0x8] sm:$0xf]
    %v105 = vld [vmem:[%s2 + $0xc] sm:$0xf]
    %v106 = vld [vmem:[%s2 + $0x10] sm:$0x1]
    %v112 = vunpack.c.l.b16 %v102
    %v113 = vunpack.c.l.b16 %v103
    %v114 = vunpack.c.l.b16 %v104
    %v115 = vunpack.c.l.b16 %v105
    %v116 = vunpack.c.l.b16 %v106
    %v117 = vpack.c.b16 %v113, %v112
    %v118 = vpack.c.b16 %v115, %v114
    %v119 = vpack.c.b16 %v116, %v116
    %vm122 = vcmask 277504
    %v124 = vsel %vm122, %v101, 0
    %vm126 = vcmask 1040384
    %v128 = vsel %vm126, %v119, 0
    %130 = vmatprep.subr.bf16.mxu0 0
    %131 = vmatpush1.bf16.msra.mxu0 0
    %132 = vmatprep.subr.bf16.mxu0 0
    %133 = vmatpush1.bf16.msra.mxu0 0
    %134 = vmatprep.subr.bf16.mxu0 0
    %135 = vmatpush1.bf16.msra.mxu0 0
    %136 = vmatprep.subr.bf16.mxu0 0
    %137 = vmatpush1.bf16.msra.mxu0 0
    %138 = vmatprep.subr.bf16.mxu0 0
    %139 = vmatpush1.bf16.msra.mxu0 0
    %140 = vmatprep.subr.bf16.mxu0 0
    %141 = vmatpush1.bf16.msra.mxu0 %v128
    %142 = vmatprep.subr.bf16.mxu0 0
    %143 = vmatpush1.bf16.msra.mxu0 %v118
    %144 = vmatprep.subr.bf16.mxu0 0
    %145 = vmatpush1.bf16.msra.mxu0 %v117
    %146 = vmatprep.subr.bf16.mxu0 0
    %147 = vmatpush2.bf16.msra.mxu0 0
    %148 = vmatprep.subr.bf16.mxu0 0
    %149 = vmatpush2.bf16.msra.mxu0 0
    %150 = vmatprep.subr.bf16.mxu0 0
    %151 = vmatpush2.bf16.msra.mxu0 0
    %152 = vmatprep.subr.bf16.mxu0 0
    %153 = vmatpush2.bf16.msra.mxu0 0
    %154 = vmatprep.subr.bf16.mxu0 0
    %155 = vmatpush2.bf16.msra.mxu0 0
    %156 = vmatprep.subr.bf16.mxu0 0
    %157 = vmatpush2.bf16.msra.mxu0 0
    %158 = vmatprep.subr.bf16.mxu0 0
    %159 = vmatpush2.bf16.msra.mxu0 0
    %160 = vmatprep.subr.bf16.mxu0 0
    %161 = vmatpush2.bf16.msra.mxu0 0
    %162 = vmatprep.mubr.bf16.mxu0 0
    %163 = vmatmul.mubr.bf16.gmra.mxu0 %v124
    %v164 = vpop.f32.mrf.mxu0
    %v165 = vadd.f32 %v85, %v164
    %v166 = vpop.f32.mrf.mxu0
    %v167 = vpop.f32.mrf.mxu0
    %v168 = vpop.f32.mrf.mxu0
    %169 = vdwg.mxu0
    %v170 = vtanh.pop %v165
    %v171 = vadd.f32 %v170, 1.0
    %v172 = vmul.f32 %v171, 0.5
    %174 = vrot.lane.b32.xlu0 %v71, 32
    %v175 = vpop.permute.xlu0 %174
    %v177 = vmul.f32 %v172, %v175
    %179 = vrot.lane.b32.xlu0 %v170, 64
    %v180 = vpop.permute.xlu0 %179
    %v182 = vmul.f32 %v172, %v180
    %184 = vrot.lane.b32.xlu0 %v182, 32
    %v185 = vpop.permute.xlu0 %184
    %v187 = vadd.f32 %v177, %v185
    %v188 = vtanh.pop %v187
    %190 = vrot.lane.b32.xlu0 %v188, 64
    %v191 = vpop.permute.xlu0 %190
    %v193 = vmul.f32 %v172, %v191
    %v194 = vpack.c.bf16 %v193, %v193
    %196 = vrot.lane.b32.xlu0 %v194, 32
    %v197 = vpop.permute.xlu0 %196
    %v202 = vunpack.c.l.b16 %v76
    %v203 = vunpack.c.l.b16 %v77
    %v204 = vunpack.c.l.b16 %v78
    %v205 = vunpack.c.l.b16 %v79
    %v206 = vpack.c.b16 %v203, %v202
    %v207 = vpack.c.b16 %v205, %v204
    %vm210 = vcmask 261120
    %v212 = vsel %vm210, %v197, 0
    %214 = vmatprep.subr.bf16.mxu0 0
    %215 = vmatpush1.bf16.msra.mxu0 0
    %216 = vmatprep.subr.bf16.mxu0 0
    %217 = vmatpush1.bf16.msra.mxu0 0
    %218 = vmatprep.subr.bf16.mxu0 0
    %219 = vmatpush1.bf16.msra.mxu0 0
    %220 = vmatprep.subr.bf16.mxu0 0
    %221 = vmatpush1.bf16.msra.mxu0 0
    %222 = vmatprep.subr.bf16.mxu0 0
    %223 = vmatpush1.bf16.msra.mxu0 0
    %224 = vmatprep.subr.bf16.mxu0 0
    %225 = vmatpush1.bf16.msra.mxu0 0
    %226 = vmatprep.subr.bf16.mxu0 0
    %227 = vmatpush1.bf16.msra.mxu0 %v207
    %228 = vmatprep.subr.bf16.mxu0 0
    %229 = vmatpush1.bf16.msra.mxu0 %v206
    %230 = vmatprep.subr.bf16.mxu0 0
    %231 = vmatpush2.bf16.msra.mxu0 0
    %232 = vmatprep.subr.bf16.mxu0 0
    %233 = vmatpush2.bf16.msra.mxu0 0
    %234 = vmatprep.subr.bf16.mxu0 0
    %235 = vmatpush2.bf16.msra.mxu0 0
    %236 = vmatprep.subr.bf16.mxu0 0
    %237 = vmatpush2.bf16.msra.mxu0 0
    %238 = vmatprep.subr.bf16.mxu0 0
    %239 = vmatpush2.bf16.msra.mxu0 0
    %240 = vmatprep.subr.bf16.mxu0 0
    %241 = vmatpush2.bf16.msra.mxu0 0
    %242 = vmatprep.subr.bf16.mxu0 0
    %243 = vmatpush2.bf16.msra.mxu0 0
    %244 = vmatprep.subr.bf16.mxu0 0
    %245 = vmatpush2.bf16.msra.mxu0 0
    %246 = vmatprep.mubr.bf16.mxu0 0
    %247 = vmatmul.mubr.bf16.gmra.mxu0 %v212
    %v248 = vpop.f32.mrf.mxu0
    %v249 = vadd.f32 %v99, %v248
    %v250 = vpop.f32.mrf.mxu0
    %v251 = vpop.f32.mrf.mxu0
    %v252 = vpop.f32.mrf.mxu0
    %253 = vdwg.mxu0
    %vm254 = vcmask 15360
    %255 = vst.msk [vmem:[#allocation8] sm:$0xff] %vm254, %v249
    %v260 = vunpack.c.l.b16 %v72
    %v261 = vunpack.c.l.b16 %v73
    %v262 = vunpack.c.l.b16 %v74
    %v263 = vunpack.c.l.b16 %v75
    %v264 = vpack.c.b16 %v261, %v260
    %v265 = vpack.c.b16 %v263, %v262
    %268 = vmatprep.subr.bf16.mxu0 0
    %269 = vmatpush1.bf16.msra.mxu0 0
    %270 = vmatprep.subr.bf16.mxu0 0
    %271 = vmatpush1.bf16.msra.mxu0 0
    %272 = vmatprep.subr.bf16.mxu0 0
    %273 = vmatpush1.bf16.msra.mxu0 0
    %274 = vmatprep.subr.bf16.mxu0 0
    %275 = vmatpush1.bf16.msra.mxu0 0
    %276 = vmatprep.subr.bf16.mxu0 0
    %277 = vmatpush1.bf16.msra.mxu0 0
    %278 = vmatprep.subr.bf16.mxu0 0
    %279 = vmatpush1.bf16.msra.mxu0 0
    %280 = vmatprep.subr.bf16.mxu0 0
    %281 = vmatpush1.bf16.msra.mxu0 %v265
    %282 = vmatprep.subr.bf16.mxu0 0
    %283 = vmatpush1.bf16.msra.mxu0 %v264
    %284 = vmatprep.subr.bf16.mxu0 0
    %285 = vmatpush2.bf16.msra.mxu0 0
    %286 = vmatprep.subr.bf16.mxu0 0
    %287 = vmatpush2.bf16.msra.mxu0 0
    %288 = vmatprep.subr.bf16.mxu0 0
    %289 = vmatpush2.bf16.msra.mxu0 0
    %290 = vmatprep.subr.bf16.mxu0 0
    %291 = vmatpush2.bf16.msra.mxu0 0
    %292 = vmatprep.subr.bf16.mxu0 0
    %293 = vmatpush2.bf16.msra.mxu0 0
    %294 = vmatprep.subr.bf16.mxu0 0
    %295 = vmatpush2.bf16.msra.mxu0 0
    %296 = vmatprep.subr.bf16.mxu0 0
    %297 = vmatpush2.bf16.msra.mxu0 0
    %298 = vmatprep.subr.bf16.mxu0 0
    %299 = vmatpush2.bf16.msra.mxu0 0
    %300 = vmatprep.mubr.bf16.mxu0 0
    %301 = vmatmul.mubr.bf16.gmra.mxu0 %v212
    %v302 = vpop.f32.mrf.mxu0
    %v303 = vadd.f32 %v92, %v302
    %v304 = vpop.f32.mrf.mxu0
    %v305 = vpop.f32.mrf.mxu0
    %v306 = vpop.f32.mrf.mxu0
    %307 = vdwg.mxu0
    %v308 = vtanh.pop %v303
    %v309 = vadd.f32 %v308, 1.0
    %v310 = vmul.f32 %v309, 0.5
    %v311 = vmul.f32 %v310, %v187
    %313 = vrot.lane.b32.xlu0 %v308, 64
    %v314 = vpop.permute.xlu0 %313
    %v316 = vmul.f32 %v310, %v314
    %318 = vrot.lane.b32.xlu0 %v316, 32
    %v319 = vpop.permute.xlu0 %318
    %v321 = vadd.f32 %v311, %v319
    %v322 = vtanh.pop %v321
    %324 = vrot.lane.b32.xlu0 %v322, 64
    %v325 = vpop.permute.xlu0 %324
    %v327 = vmul.f32 %v310, %v325
    %v328 = vpack.c.bf16 %v327, %v327
    %330 = vrot.lane.b32.xlu0 %v328, 32
    %v331 = vpop.permute.xlu0 %330
    %v333 = vsel %vm210, %v331, 0
    %335 = vmatprep.subr.bf16.mxu0 0
    %336 = vmatpush1.bf16.msra.mxu0 0
    %337 = vmatprep.subr.bf16.mxu0 0
    %338 = vmatpush1.bf16.msra.mxu0 0
    %339 = vmatprep.subr.bf16.mxu0 0
    %340 = vmatpush1.bf16.msra.mxu0 0
    %341 = vmatprep.subr.bf16.mxu0 0
    %342 = vmatpush1.bf16.msra.mxu0 0
    %343 = vmatprep.subr.bf16.mxu0 0
    %344 = vmatpush1.bf16.msra.mxu0 0
    %345 = vmatprep.subr.bf16.mxu0 0
    %346 = vmatpush1.bf16.msra.mxu0 0
    %347 = vmatprep.subr.bf16.mxu0 0
    %348 = vmatpush1.bf16.msra.mxu0 %v207
    %349 = vmatprep.subr.bf16.mxu0 0
    %350 = vmatpush1.bf16.msra.mxu0 %v206
    %351 = vmatprep.subr.bf16.mxu0 0
    %352 = vmatpush2.bf16.msra.mxu0 0
    %353 = vmatprep.subr.bf16.mxu0 0
    %354 = vmatpush2.bf16.msra.mxu0 0
    %355 = vmatprep.subr.bf16.mxu0 0
    %356 = vmatpush2.bf16.msra.mxu0 0
    %357 = vmatprep.subr.bf16.mxu0 0
    %358 = vmatpush2.bf16.msra.mxu0 0
    %359 = vmatprep.subr.bf16.mxu0 0
    %360 = vmatpush2.bf16.msra.mxu0 0
    %361 = vmatprep.subr.bf16.mxu0 0
    %362 = vmatpush2.bf16.msra.mxu0 0
    %363 = vmatprep.subr.bf16.mxu0 0
    %364 = vmatpush2.bf16.msra.mxu0 0
    %365 = vmatprep.subr.bf16.mxu0 0
    %366 = vmatpush2.bf16.msra.mxu0 0
    %367 = vmatprep.mubr.bf16.mxu0 0
    %368 = vmatmul.mubr.bf16.gmra.mxu0 %v333
    %v369 = vpop.f32.mrf.mxu0
    %v370 = vadd.f32 %v99, %v369
    %v371 = vpop.f32.mrf.mxu0
    %v372 = vpop.f32.mrf.mxu0
    %v373 = vpop.f32.mrf.mxu0
    %374 = vdwg.mxu0
    %376 = vrot.lane.b32.xlu0 %v370, 2
    %v377 = vpop.permute.xlu0 %376
    %vm379 = vcmask 31760
    %380 = vst.msk [vmem:[#allocation8] sm:$0xff] %vm379, %v377
    %381 = vmatprep.subr.bf16.mxu0 0
    %382 = vmatpush1.bf16.msra.mxu0 0
    %383 = vmatprep.subr.bf16.mxu0 0
    %384 = vmatpush1.bf16.msra.mxu0 0
    %385 = vmatprep.subr.bf16.mxu0 0
    %386 = vmatpush1.bf16.msra.mxu0 0
    %387 = vmatprep.subr.bf16.mxu0 0
    %388 = vmatpush1.bf16.msra.mxu0 0
    %389 = vmatprep.subr.bf16.mxu0 0
    %390 = vmatpush1.bf16.msra.mxu0 0
    %391 = vmatprep.subr.bf16.mxu0 0
    %392 = vmatpush1.bf16.msra.mxu0 0
    %393 = vmatprep.subr.bf16.mxu0 0
    %394 = vmatpush1.bf16.msra.mxu0 %v265
    %395 = vmatprep.subr.bf16.mxu0 0
    %396 = vmatpush1.bf16.msra.mxu0 %v264
    %397 = vmatprep.subr.bf16.mxu0 0
    %398 = vmatpush2.bf16.msra.mxu0 0
    %399 = vmatprep.subr.bf16.mxu0 0
    %400 = vmatpush2.bf16.msra.mxu0 0
    %401 = vmatprep.subr.bf16.mxu0 0
    %402 = vmatpush2.bf16.msra.mxu0 0
    %403 = vmatprep.subr.bf16.mxu0 0
    %404 = vmatpush2.bf16.msra.mxu0 0
    %405 = vmatprep.subr.bf16.mxu0 0
    %406 = vmatpush2.bf16.msra.mxu0 0
    %407 = vmatprep.subr.bf16.mxu0 0
    %408 = vmatpush2.bf16.msra.mxu0 0
    %409 = vmatprep.subr.bf16.mxu0 0
    %410 = vmatpush2.bf16.msra.mxu0 0
    %411 = vmatprep.subr.bf16.mxu0 0
    %412 = vmatpush2.bf16.msra.mxu0 0
    %413 = vmatprep.mubr.bf16.mxu0 0
    %414 = vmatmul.mubr.bf16.gmra.mxu0 %v333
    %v415 = vpop.f32.mrf.mxu0
    %v416 = vadd.f32 %v92, %v415
    %v417 = vpop.f32.mrf.mxu0
    %v418 = vpop.f32.mrf.mxu0
    %v419 = vpop.f32.mrf.mxu0
    %420 = vdwg.mxu0
    %v421 = vtanh.pop %v416
    %v422 = vadd.f32 %v421, 1.0
    %v423 = vmul.f32 %v422, 0.5
    %v424 = vmul.f32 %v423, %v321
    %426 = vrot.lane.b32.xlu0 %v421, 64
    %v427 = vpop.permute.xlu0 %426
    %v429 = vmul.f32 %v423, %v427
    %431 = vrot.lane.b32.xlu0 %v429, 32
    %v432 = vpop.permute.xlu0 %431
    %v434 = vadd.f32 %v424, %v432
    %v435 = vtanh.pop %v434
    %437 = vrot.lane.b32.xlu0 %v435, 64
    %v438 = vpop.permute.xlu0 %437
    %v440 = vmul.f32 %v423, %v438
    %v441 = vpack.c.bf16 %v440, %v440
    %443 = vrot.lane.b32.xlu0 %v441, 32
    %v444 = vpop.permute.xlu0 %443
    %v446 = vsel %vm210, %v444, 0
    %448 = vmatprep.subr.bf16.mxu0 0
    %449 = vmatpush1.bf16.msra.mxu0 0
    %450 = vmatprep.subr.bf16.mxu0 0
    %451 = vmatpush1.bf16.msra.mxu0 0
    %452 = vmatprep.subr.bf16.mxu0 0
    %453 = vmatpush1.bf16.msra.mxu0 0
    %454 = vmatprep.subr.bf16.mxu0 0
    %455 = vmatpush1.bf16.msra.mxu0 0
    %456 = vmatprep.subr.bf16.mxu0 0
    %457 = vmatpush1.bf16.msra.mxu0 0
    %458 = vmatprep.subr.bf16.mxu0 0
    %459 = vmatpush1.bf16.msra.mxu0 0
    %460 = vmatprep.subr.bf16.mxu0 0
    %461 = vmatpush1.bf16.msra.mxu0 %v207
    %462 = vmatprep.subr.bf16.mxu0 0
    %463 = vmatpush1.bf16.msra.mxu0 %v206
    %464 = vmatprep.subr.bf16.mxu0 0
    %465 = vmatpush2.bf16.msra.mxu0 0
    %466 = vmatprep.subr.bf16.mxu0 0
    %467 = vmatpush2.bf16.msra.mxu0 0
    %468 = vmatprep.subr.bf16.mxu0 0
    %469 = vmatpush2.bf16.msra.mxu0 0
    %470 = vmatprep.subr.bf16.mxu0 0
    %471 = vmatpush2.bf16.msra.mxu0 0
    %472 = vmatprep.subr.bf16.mxu0 0
    %473 = vmatpush2.bf16.msra.mxu0 0
    %474 = vmatprep.subr.bf16.mxu0 0
    %475 = vmatpush2.bf16.msra.mxu0 0
    %476 = vmatprep.subr.bf16.mxu0 0
    %477 = vmatpush2.bf16.msra.mxu0 0
    %478 = vmatprep.subr.bf16.mxu0 0
    %479 = vmatpush2.bf16.msra.mxu0 0
    %480 = vmatprep.mubr.bf16.mxu0 0
    %481 = vmatmul.mubr.bf16.gmra.mxu0 %v446
    %v482 = vpop.f32.mrf.mxu0
    %v483 = vadd.f32 %v99, %v482
    %v484 = vpop.f32.mrf.mxu0
    %v485 = vpop.f32.mrf.mxu0
    %v486 = vpop.f32.mrf.mxu0
    %487 = vdwg.mxu0
    %489 = vrot.lane.b32.xlu0 %v483, 4
    %v490 = vpop.permute.xlu0 %489
    %vm492 = vcmask 48160
    %493 = vst.msk [vmem:[#allocation8] sm:$0xff] %vm492, %v490
    %494 = vmatprep.subr.bf16.mxu0 0
    %495 = vmatpush1.bf16.msra.mxu0 0
    %496 = vmatprep.subr.bf16.mxu0 0
    %497 = vmatpush1.bf16.msra.mxu0 0
    %498 = vmatprep.subr.bf16.mxu0 0
    %499 = vmatpush1.bf16.msra.mxu0 0
    %500 = vmatprep.subr.bf16.mxu0 0
    %501 = vmatpush1.bf16.msra.mxu0 0
    %502 = vmatprep.subr.bf16.mxu0 0
    %503 = vmatpush1.bf16.msra.mxu0 0
    %504 = vmatprep.subr.bf16.mxu0 0
    %505 = vmatpush1.bf16.msra.mxu0 0
    %506 = vmatprep.subr.bf16.mxu0 0
    %507 = vmatpush1.bf16.msra.mxu0 %v265
    %508 = vmatprep.subr.bf16.mxu0 0
    %509 = vmatpush1.bf16.msra.mxu0 %v264
    %510 = vmatprep.subr.bf16.mxu0 0
    %511 = vmatpush2.bf16.msra.mxu0 0
    %512 = vmatprep.subr.bf16.mxu0 0
    %513 = vmatpush2.bf16.msra.mxu0 0
    %514 = vmatprep.subr.bf16.mxu0 0
    %515 = vmatpush2.bf16.msra.mxu0 0
    %516 = vmatprep.subr.bf16.mxu0 0
    %517 = vmatpush2.bf16.msra.mxu0 0
    %518 = vmatprep.subr.bf16.mxu0 0
    %519 = vmatpush2.bf16.msra.mxu0 0
    %520 = vmatprep.subr.bf16.mxu0 0
    %521 = vmatpush2.bf16.msra.mxu0 0
    %522 = vmatprep.subr.bf16.mxu0 0
    %523 = vmatpush2.bf16.msra.mxu0 0
    %524 = vmatprep.subr.bf16.mxu0 0
    %525 = vmatpush2.bf16.msra.mxu0 0
    %526 = vmatprep.mubr.bf16.mxu0 0
    %527 = vmatmul.mubr.bf16.gmra.mxu0 %v446
    %v528 = vpop.f32.mrf.mxu0
    %v529 = vadd.f32 %v92, %v528
    %v530 = vpop.f32.mrf.mxu0
    %v531 = vpop.f32.mrf.mxu0
    %v532 = vpop.f32.mrf.mxu0
    %533 = vdwg.mxu0
    %v534 = vtanh.pop %v529
    %v535 = vadd.f32 %v534, 1.0
    %v536 = vmul.f32 %v535, 0.5
    %v537 = vmul.f32 %v536, %v434
    %539 = vrot.lane.b32.xlu0 %v534, 64
    %v540 = vpop.permute.xlu0 %539
    %v542 = vmul.f32 %v536, %v540
    %544 = vrot.lane.b32.xlu0 %v542, 32
    %v545 = vpop.permute.xlu0 %544
    %v547 = vadd.f32 %v537, %v545
    %v548 = vtanh.pop %v547
    %550 = vrot.lane.b32.xlu0 %v548, 64
    %v551 = vpop.permute.xlu0 %550
    %v553 = vmul.f32 %v536, %v551
    %v554 = vpack.c.bf16 %v553, %v553
    %556 = vrot.lane.b32.xlu0 %v554, 32
    %v557 = vpop.permute.xlu0 %556
    %v559 = vsel %vm210, %v557, 0
    %561 = vmatprep.subr.bf16.mxu0 0
    %562 = vmatpush1.bf16.msra.mxu0 0
    %563 = vmatprep.subr.bf16.mxu0 0
    %564 = vmatpush1.bf16.msra.mxu0 0
    %565 = vmatprep.subr.bf16.mxu0 0
    %566 = vmatpush1.bf16.msra.mxu0 0
    %567 = vmatprep.subr.bf16.mxu0 0
    %568 = vmatpush1.bf16.msra.mxu0 0
    %569 = vmatprep.subr.bf16.mxu0 0
    %570 = vmatpush1.bf16.msra.mxu0 0
    %571 = vmatprep.subr.bf16.mxu0 0
    %572 = vmatpush1.bf16.msra.mxu0 0
    %573 = vmatprep.subr.bf16.mxu0 0
    %574 = vmatpush1.bf16.msra.mxu0 %v207
    %575 = vmatprep.subr.bf16.mxu0 0
    %576 = vmatpush1.bf16.msra.mxu0 %v206
    %577 = vmatprep.subr.bf16.mxu0 0
    %578 = vmatpush2.bf16.msra.mxu0 0
    %579 = vmatprep.subr.bf16.mxu0 0
    %580 = vmatpush2.bf16.msra.mxu0 0
    %581 = vmatprep.subr.bf16.mxu0 0
    %582 = vmatpush2.bf16.msra.mxu0 0
    %583 = vmatprep.subr.bf16.mxu0 0
    %584 = vmatpush2.bf16.msra.mxu0 0
    %585 = vmatprep.subr.bf16.mxu0 0
    %586 = vmatpush2.bf16.msra.mxu0 0
    %587 = vmatprep.subr.bf16.mxu0 0
    %588 = vmatpush2.bf16.msra.mxu0 0
    %589 = vmatprep.subr.bf16.mxu0 0
    %590 = vmatpush2.bf16.msra.mxu0 0
    %591 = vmatprep.subr.bf16.mxu0 0
    %592 = vmatpush2.bf16.msra.mxu0 0
    %593 = vmatprep.mubr.bf16.mxu0 0
    %594 = vmatmul.mubr.bf16.gmra.mxu0 %v559
    %v595 = vpop.f32.mrf.mxu0
    %v596 = vadd.f32 %v99, %v595
    %v597 = vpop.f32.mrf.mxu0
    %v598 = vpop.f32.mrf.mxu0
    %v599 = vpop.f32.mrf.mxu0
    %600 = vdwg.mxu0
    %602 = vrot.lane.b32.xlu0 %v596, 6
    %v603 = vpop.permute.xlu0 %602
    %vm605 = vcmask 64560
    %606 = vst.msk [vmem:[#allocation8] sm:$0xff] %vm605, %v603
    %607 = vmatprep.subr.bf16.mxu0 0
    %608 = vmatpush1.bf16.msra.mxu0 0
    %609 = vmatprep.subr.bf16.mxu0 0
    %610 = vmatpush1.bf16.msra.mxu0 0
    %611 = vmatprep.subr.bf16.mxu0 0
    %612 = vmatpush1.bf16.msra.mxu0 0
    %613 = vmatprep.subr.bf16.mxu0 0
    %614 = vmatpush1.bf16.msra.mxu0 0
    %615 = vmatprep.subr.bf16.mxu0 0
    %616 = vmatpush1.bf16.msra.mxu0 0
    %617 = vmatprep.subr.bf16.mxu0 0
    %618 = vmatpush1.bf16.msra.mxu0 0
    %619 = vmatprep.subr.bf16.mxu0 0
    %620 = vmatpush1.bf16.msra.mxu0 %v265
    %621 = vmatprep.subr.bf16.mxu0 0
    %622 = vmatpush1.bf16.msra.mxu0 %v264
    %623 = vmatprep.subr.bf16.mxu0 0
    %624 = vmatpush2.bf16.msra.mxu0 0
    %625 = vmatprep.subr.bf16.mxu0 0
    %626 = vmatpush2.bf16.msra.mxu0 0
    %627 = vmatprep.subr.bf16.mxu0 0
    %628 = vmatpush2.bf16.msra.mxu0 0
    %629 = vmatprep.subr.bf16.mxu0 0
    %630 = vmatpush2.bf16.msra.mxu0 0
    %631 = vmatprep.subr.bf16.mxu0 0
    %632 = vmatpush2.bf16.msra.mxu0 0
    %633 = vmatprep.subr.bf16.mxu0 0
    %634 = vmatpush2.bf16.msra.mxu0 0
    %635 = vmatprep.subr.bf16.mxu0 0
    %636 = vmatpush2.bf16.msra.mxu0 0
    %637 = vmatprep.subr.bf16.mxu0 0
    %638 = vmatpush2.bf16.msra.mxu0 0
    %639 = vmatprep.mubr.bf16.mxu0 0
    %640 = vmatmul.mubr.bf16.gmra.mxu0 %v559
    %v641 = vpop.f32.mrf.mxu0
    %v642 = vadd.f32 %v92, %v641
    %v643 = vpop.f32.mrf.mxu0
    %v644 = vpop.f32.mrf.mxu0
    %v645 = vpop.f32.mrf.mxu0
    %646 = vdwg.mxu0
    %v647 = vtanh.pop %v642
    %v648 = vadd.f32 %v647, 1.0
    %v649 = vmul.f32 %v648, 0.5
    %v650 = vmul.f32 %v649, %v547
    %652 = vrot.lane.b32.xlu0 %v647, 64
    %v653 = vpop.permute.xlu0 %652
    %v655 = vmul.f32 %v649, %v653
    %657 = vrot.lane.b32.xlu0 %v655, 32
    %v658 = vpop.permute.xlu0 %657
    %v660 = vadd.f32 %v650, %v658
    %v661 = vtanh.pop %v660
    %663 = vrot.lane.b32.xlu0 %v661, 64
    %v664 = vpop.permute.xlu0 %663
    %v666 = vmul.f32 %v649, %v664
    %v667 = vpack.c.bf16 %v666, %v666
    %669 = vrot.lane.b32.xlu0 %v667, 32
    %v670 = vpop.permute.xlu0 %669
    %v672 = vsel %vm210, %v670, 0
    %674 = vmatprep.subr.bf16.mxu0 0
    %675 = vmatpush1.bf16.msra.mxu0 0
    %676 = vmatprep.subr.bf16.mxu0 0
    %677 = vmatpush1.bf16.msra.mxu0 0
    %678 = vmatprep.subr.bf16.mxu0 0
    %679 = vmatpush1.bf16.msra.mxu0 0
    %680 = vmatprep.subr.bf16.mxu0 0
    %681 = vmatpush1.bf16.msra.mxu0 0
    %682 = vmatprep.subr.bf16.mxu0 0
    %683 = vmatpush1.bf16.msra.mxu0 0
    %684 = vmatprep.subr.bf16.mxu0 0
    %685 = vmatpush1.bf16.msra.mxu0 0
    %686 = vmatprep.subr.bf16.mxu0 0
    %687 = vmatpush1.bf16.msra.mxu0 %v207
    %688 = vmatprep.subr.bf16.mxu0 0
    %689 = vmatpush1.bf16.msra.mxu0 %v206
    %690 = vmatprep.subr.bf16.mxu0 0
    %691 = vmatpush2.bf16.msra.mxu0 0
    %692 = vmatprep.subr.bf16.mxu0 0
    %693 = vmatpush2.bf16.msra.mxu0 0
    %694 = vmatprep.subr.bf16.mxu0 0
    %695 = vmatpush2.bf16.msra.mxu0 0
    %696 = vmatprep.subr.bf16.mxu0 0
    %697 = vmatpush2.bf16.msra.mxu0 0
    %698 = vmatprep.subr.bf16.mxu0 0
    %699 = vmatpush2.bf16.msra.mxu0 0
    %700 = vmatprep.subr.bf16.mxu0 0
    %701 = vmatpush2.bf16.msra.mxu0 0
    %702 = vmatprep.subr.bf16.mxu0 0
    %703 = vmatpush2.bf16.msra.mxu0 0
    %704 = vmatprep.subr.bf16.mxu0 0
    %705 = vmatpush2.bf16.msra.mxu0 0
    %706 = vmatprep.mubr.bf16.mxu0 0
    %707 = vmatmul.mubr.bf16.gmra.mxu0 %v672
    %v708 = vpop.f32.mrf.mxu0
    %v709 = vadd.f32 %v99, %v708
    %v710 = vpop.f32.mrf.mxu0
    %v711 = vpop.f32.mrf.mxu0
    %v712 = vpop.f32.mrf.mxu0
    %713 = vdwg.mxu0
    %715 = vrot.lane.b32.xlu0 %v709, 8
    %v716 = vpop.permute.xlu0 %715
    %vm718 = vcmask 80960
    %719 = vst.msk [vmem:[#allocation8] sm:$0xff] %vm718, %v716
    %720 = vmatprep.subr.bf16.mxu0 0
    %721 = vmatpush1.bf16.msra.mxu0 0
    %722 = vmatprep.subr.bf16.mxu0 0
    %723 = vmatpush1.bf16.msra.mxu0 0
    %724 = vmatprep.subr.bf16.mxu0 0
    %725 = vmatpush1.bf16.msra.mxu0 0
    %726 = vmatprep.subr.bf16.mxu0 0
    %727 = vmatpush1.bf16.msra.mxu0 0
    %728 = vmatprep.subr.bf16.mxu0 0
    %729 = vmatpush1.bf16.msra.mxu0 0
    %730 = vmatprep.subr.bf16.mxu0 0
    %731 = vmatpush1.bf16.msra.mxu0 0
    %732 = vmatprep.subr.bf16.mxu0 0
    %733 = vmatpush1.bf16.msra.mxu0 %v265
    %734 = vmatprep.subr.bf16.mxu0 0
    %735 = vmatpush1.bf16.msra.mxu0 %v264
    %736 = vmatprep.subr.bf16.mxu0 0
    %737 = vmatpush2.bf16.msra.mxu0 0
    %738 = vmatprep.subr.bf16.mxu0 0
    %739 = vmatpush2.bf16.msra.mxu0 0
    %740 = vmatprep.subr.bf16.mxu0 0
    %741 = vmatpush2.bf16.msra.mxu0 0
    %742 = vmatprep.subr.bf16.mxu0 0
    %743 = vmatpush2.bf16.msra.mxu0 0
    %744 = vmatprep.subr.bf16.mxu0 0
    %745 = vmatpush2.bf16.msra.mxu0 0
    %746 = vmatprep.subr.bf16.mxu0 0
    %747 = vmatpush2.bf16.msra.mxu0 0
    %748 = vmatprep.subr.bf16.mxu0 0
    %749 = vmatpush2.bf16.msra.mxu0 0
    %750 = vmatprep.subr.bf16.mxu0 0
    %751 = vmatpush2.bf16.msra.mxu0 0
    %752 = vmatprep.mubr.bf16.mxu0 0
    %753 = vmatmul.mubr.bf16.gmra.mxu0 %v672
    %v754 = vpop.f32.mrf.mxu0
    %v755 = vadd.f32 %v92, %v754
    %v756 = vpop.f32.mrf.mxu0
    %v757 = vpop.f32.mrf.mxu0
    %v758 = vpop.f32.mrf.mxu0
    %759 = vdwg.mxu0
    %v760 = vtanh.pop %v755
    %v761 = vadd.f32 %v760, 1.0
    %v762 = vmul.f32 %v761, 0.5
    %v763 = vmul.f32 %v762, %v660
    %765 = vrot.lane.b32.xlu0 %v760, 64
    %v766 = vpop.permute.xlu0 %765
    %v768 = vmul.f32 %v762, %v766
    %770 = vrot.lane.b32.xlu0 %v768, 32
    %v771 = vpop.permute.xlu0 %770
    %v773 = vadd.f32 %v763, %v771
    %v774 = vtanh.pop %v773
    %776 = vrot.lane.b32.xlu0 %v774, 64
    %v777 = vpop.permute.xlu0 %776
    %v779 = vmul.f32 %v762, %v777
    %v780 = vpack.c.bf16 %v779, %v779
    %782 = vrot.lane.b32.xlu0 %v780, 32
    %v783 = vpop.permute.xlu0 %782
    %v785 = vsel %vm210, %v783, 0
    %787 = vmatprep.subr.bf16.mxu0 0
    %788 = vmatpush1.bf16.msra.mxu0 0
    %789 = vmatprep.subr.bf16.mxu0 0
    %790 = vmatpush1.bf16.msra.mxu0 0
    %791 = vmatprep.subr.bf16.mxu0 0
    %792 = vmatpush1.bf16.msra.mxu0 0
    %793 = vmatprep.subr.bf16.mxu0 0
    %794 = vmatpush1.bf16.msra.mxu0 0
    %795 = vmatprep.subr.bf16.mxu0 0
    %796 = vmatpush1.bf16.msra.mxu0 0
    %797 = vmatprep.subr.bf16.mxu0 0
    %798 = vmatpush1.bf16.msra.mxu0 0
    %799 = vmatprep.subr.bf16.mxu0 0
    %800 = vmatpush1.bf16.msra.mxu0 %v207
    %801 = vmatprep.subr.bf16.mxu0 0
    %802 = vmatpush1.bf16.msra.mxu0 %v206
    %803 = vmatprep.subr.bf16.mxu0 0
    %804 = vmatpush2.bf16.msra.mxu0 0
    %805 = vmatprep.subr.bf16.mxu0 0
    %806 = vmatpush2.bf16.msra.mxu0 0
    %807 = vmatprep.subr.bf16.mxu0 0
    %808 = vmatpush2.bf16.msra.mxu0 0
    %809 = vmatprep.subr.bf16.mxu0 0
    %810 = vmatpush2.bf16.msra.mxu0 0
    %811 = vmatprep.subr.bf16.mxu0 0
    %812 = vmatpush2.bf16.msra.mxu0 0
    %813 = vmatprep.subr.bf16.mxu0 0
    %814 = vmatpush2.bf16.msra.mxu0 0
    %815 = vmatprep.subr.bf16.mxu0 0
    %816 = vmatpush2.bf16.msra.mxu0 0
    %817 = vmatprep.subr.bf16.mxu0 0
    %818 = vmatpush2.bf16.msra.mxu0 0
    %819 = vmatprep.mubr.bf16.mxu0 0
    %820 = vmatmul.mubr.bf16.gmra.mxu0 %v785
    %v821 = vpop.f32.mrf.mxu0
    %v822 = vadd.f32 %v99, %v821
    %v823 = vpop.f32.mrf.mxu0
    %v824 = vpop.f32.mrf.mxu0
    %v825 = vpop.f32.mrf.mxu0
    %826 = vdwg.mxu0
    %828 = vrot.lane.b32.xlu0 %v822, 10
    %v829 = vpop.permute.xlu0 %828
    %vm831 = vcmask 97360
    %832 = vst.msk [vmem:[#allocation8] sm:$0xff] %vm831, %v829
    %833 = vmatprep.subr.bf16.mxu0 0
    %834 = vmatpush1.bf16.msra.mxu0 0
    %835 = vmatprep.subr.bf16.mxu0 0
    %836 = vmatpush1.bf16.msra.mxu0 0
    %837 = vmatprep.subr.bf16.mxu0 0
    %838 = vmatpush1.bf16.msra.mxu0 0
    %839 = vmatprep.subr.bf16.mxu0 0
    %840 = vmatpush1.bf16.msra.mxu0 0
    %841 = vmatprep.subr.bf16.mxu0 0
    %842 = vmatpush1.bf16.msra.mxu0 0
    %843 = vmatprep.subr.bf16.mxu0 0
    %844 = vmatpush1.bf16.msra.mxu0 0
    %845 = vmatprep.subr.bf16.mxu0 0
    %846 = vmatpush1.bf16.msra.mxu0 %v265
    %847 = vmatprep.subr.bf16.mxu0 0
    %848 = vmatpush1.bf16.msra.mxu0 %v264
    %849 = vmatprep.subr.bf16.mxu0 0
    %850 = vmatpush2.bf16.msra.mxu0 0
    %851 = vmatprep.subr.bf16.mxu0 0
    %852 = vmatpush2.bf16.msra.mxu0 0
    %853 = vmatprep.subr.bf16.mxu0 0
    %854 = vmatpush2.bf16.msra.mxu0 0
    %855 = vmatprep.subr.bf16.mxu0 0
    %856 = vmatpush2.bf16.msra.mxu0 0
    %857 = vmatprep.subr.bf16.mxu0 0
    %858 = vmatpush2.bf16.msra.mxu0 0
    %859 = vmatprep.subr.bf16.mxu0 0
    %860 = vmatpush2.bf16.msra.mxu0 0
    %861 = vmatprep.subr.bf16.mxu0 0
    %862 = vmatpush2.bf16.msra.mxu0 0
    %863 = vmatprep.subr.bf16.mxu0 0
    %864 = vmatpush2.bf16.msra.mxu0 0
    %865 = vmatprep.mubr.bf16.mxu0 0
    %866 = vmatmul.mubr.bf16.gmra.mxu0 %v785
    %v867 = vpop.f32.mrf.mxu0
    %v868 = vadd.f32 %v92, %v867
    %v869 = vpop.f32.mrf.mxu0
    %v870 = vpop.f32.mrf.mxu0
    %v871 = vpop.f32.mrf.mxu0
    %872 = vdwg.mxu0
    %v873 = vtanh.pop %v868
    %v874 = vadd.f32 %v873, 1.0
    %v875 = vmul.f32 %v874, 0.5
    %v876 = vmul.f32 %v875, %v773
    %878 = vrot.lane.b32.xlu0 %v873, 64
    %v879 = vpop.permute.xlu0 %878
    %v881 = vmul.f32 %v875, %v879
    %883 = vrot.lane.b32.xlu0 %v881, 32
    %v884 = vpop.permute.xlu0 %883
    %v886 = vadd.f32 %v876, %v884
    %v887 = vtanh.pop %v886
    %889 = vrot.lane.b32.xlu0 %v887, 64
    %v890 = vpop.permute.xlu0 %889
    %v892 = vmul.f32 %v875, %v890
    %v893 = vpack.c.bf16 %v892, %v892
    %895 = vrot.lane.b32.xlu0 %v893, 32
    %v896 = vpop.permute.xlu0 %895
    %v898 = vsel %vm210, %v896, 0
    %900 = vmatprep.subr.bf16.mxu0 0
    %901 = vmatpush1.bf16.msra.mxu0 0
    %902 = vmatprep.subr.bf16.mxu0 0
    %903 = vmatpush1.bf16.msra.mxu0 0
    %904 = vmatprep.subr.bf16.mxu0 0
    %905 = vmatpush1.bf16.msra.mxu0 0
    %906 = vmatprep.subr.bf16.mxu0 0
    %907 = vmatpush1.bf16.msra.mxu0 0
    %908 = vmatprep.subr.bf16.mxu0 0
    %909 = vmatpush1.bf16.msra.mxu0 0
    %910 = vmatprep.subr.bf16.mxu0 0
    %911 = vmatpush1.bf16.msra.mxu0 0
    %912 = vmatprep.subr.bf16.mxu0 0
    %913 = vmatpush1.bf16.msra.mxu0 %v207
    %914 = vmatprep.subr.bf16.mxu0 0
    %915 = vmatpush1.bf16.msra.mxu0 %v206
    %916 = vmatprep.subr.bf16.mxu0 0
    %917 = vmatpush2.bf16.msra.mxu0 0
    %918 = vmatprep.subr.bf16.mxu0 0
    %919 = vmatpush2.bf16.msra.mxu0 0
    %920 = vmatprep.subr.bf16.mxu0 0
    %921 = vmatpush2.bf16.msra.mxu0 0
    %922 = vmatprep.subr.bf16.mxu0 0
    %923 = vmatpush2.bf16.msra.mxu0 0
    %924 = vmatprep.subr.bf16.mxu0 0
    %925 = vmatpush2.bf16.msra.mxu0 0
    %926 = vmatprep.subr.bf16.mxu0 0
    %927 = vmatpush2.bf16.msra.mxu0 0
    %928 = vmatprep.subr.bf16.mxu0 0
    %929 = vmatpush2.bf16.msra.mxu0 0
    %930 = vmatprep.subr.bf16.mxu0 0
    %931 = vmatpush2.bf16.msra.mxu0 0
    %932 = vmatprep.mubr.bf16.mxu0 0
    %933 = vmatmul.mubr.bf16.gmra.mxu0 %v898
    %v934 = vpop.f32.mrf.mxu0
    %v935 = vadd.f32 %v99, %v934
    %v936 = vpop.f32.mrf.mxu0
    %v937 = vpop.f32.mrf.mxu0
    %v938 = vpop.f32.mrf.mxu0
    %939 = vdwg.mxu0
    %941 = vrot.lane.b32.xlu0 %v935, 12
    %v942 = vpop.permute.xlu0 %941
    %vm944 = vcmask 113760
    %945 = vst.msk [vmem:[#allocation8] sm:$0xff] %vm944, %v942
    %946 = vmatprep.subr.bf16.mxu0 0
    %947 = vmatpush1.bf16.msra.mxu0 0
    %948 = vmatprep.subr.bf16.mxu0 0
    %949 = vmatpush1.bf16.msra.mxu0 0
    %950 = vmatprep.subr.bf16.mxu0 0
    %951 = vmatpush1.bf16.msra.mxu0 0
    %952 = vmatprep.subr.bf16.mxu0 0
    %953 = vmatpush1.bf16.msra.mxu0 0
    %954 = vmatprep.subr.bf16.mxu0 0
    %955 = vmatpush1.bf16.msra.mxu0 0
    %956 = vmatprep.subr.bf16.mxu0 0
    %957 = vmatpush1.bf16.msra.mxu0 0
    %958 = vmatprep.subr.bf16.mxu0 0
    %959 = vmatpush1.bf16.msra.mxu0 %v265
    %960 = vmatprep.subr.bf16.mxu0 0
    %961 = vmatpush1.bf16.msra.mxu0 %v264
    %962 = vmatprep.subr.bf16.mxu0 0
    %963 = vmatpush2.bf16.msra.mxu0 0
    %964 = vmatprep.subr.bf16.mxu0 0
    %965 = vmatpush2.bf16.msra.mxu0 0
    %966 = vmatprep.subr.bf16.mxu0 0
    %967 = vmatpush2.bf16.msra.mxu0 0
    %968 = vmatprep.subr.bf16.mxu0 0
    %969 = vmatpush2.bf16.msra.mxu0 0
    %970 = vmatprep.subr.bf16.mxu0 0
    %971 = vmatpush2.bf16.msra.mxu0 0
    %972 = vmatprep.subr.bf16.mxu0 0
    %973 = vmatpush2.bf16.msra.mxu0 0
    %974 = vmatprep.subr.bf16.mxu0 0
    %975 = vmatpush2.bf16.msra.mxu0 0
    %976 = vmatprep.subr.bf16.mxu0 0
    %977 = vmatpush2.bf16.msra.mxu0 0
    %978 = vmatprep.mubr.bf16.mxu0 0
    %979 = vmatmul.mubr.bf16.gmra.mxu0 %v898
    %v980 = vpop.f32.mrf.mxu0
    %v981 = vadd.f32 %v92, %v980
    %v982 = vpop.f32.mrf.mxu0
    %v983 = vpop.f32.mrf.mxu0
    %v984 = vpop.f32.mrf.mxu0
    %985 = vdwg.mxu0
    %v986 = vtanh.pop %v981
    %v987 = vadd.f32 %v986, 1.0
    %v988 = vmul.f32 %v987, 0.5
    %v989 = vmul.f32 %v988, %v886
    %991 = vrot.lane.b32.xlu0 %v986, 64
    %v992 = vpop.permute.xlu0 %991
    %v994 = vmul.f32 %v988, %v992
    %996 = vrot.lane.b32.xlu0 %v994, 32
    %v997 = vpop.permute.xlu0 %996
    %v999 = vadd.f32 %v989, %v997
    %v1000 = vtanh.pop %v999
    %1002 = vrot.lane.b32.xlu0 %v1000, 64
    %v1003 = vpop.permute.xlu0 %1002
    %v1005 = vmul.f32 %v988, %v1003
    %v1006 = vpack.c.bf16 %v1005, %v1005
    %1008 = vrot.lane.b32.xlu0 %v1006, 32
    %v1009 = vpop.permute.xlu0 %1008
    %v1011 = vsel %vm210, %v1009, 0
    %1013 = vmatprep.subr.bf16.mxu0 0
    %1014 = vmatpush1.bf16.msra.mxu0 0
    %1015 = vmatprep.subr.bf16.mxu0 0
    %1016 = vmatpush1.bf16.msra.mxu0 0
    %1017 = vmatprep.subr.bf16.mxu0 0
    %1018 = vmatpush1.bf16.msra.mxu0 0
    %1019 = vmatprep.subr.bf16.mxu0 0
    %1020 = vmatpush1.bf16.msra.mxu0 0
    %1021 = vmatprep.subr.bf16.mxu0 0
    %1022 = vmatpush1.bf16.msra.mxu0 0
    %1023 = vmatprep.subr.bf16.mxu0 0
    %1024 = vmatpush1.bf16.msra.mxu0 0
    %1025 = vmatprep.subr.bf16.mxu0 0
    %1026 = vmatpush1.bf16.msra.mxu0 %v207
    %1027 = vmatprep.subr.bf16.mxu0 0
    %1028 = vmatpush1.bf16.msra.mxu0 %v206
    %1029 = vmatprep.subr.bf16.mxu0 0
    %1030 = vmatpush2.bf16.msra.mxu0 0
    %1031 = vmatprep.subr.bf16.mxu0 0
    %1032 = vmatpush2.bf16.msra.mxu0 0
    %1033 = vmatprep.subr.bf16.mxu0 0
    %1034 = vmatpush2.bf16.msra.mxu0 0
    %1035 = vmatprep.subr.bf16.mxu0 0
    %1036 = vmatpush2.bf16.msra.mxu0 0
    %1037 = vmatprep.subr.bf16.mxu0 0
    %1038 = vmatpush2.bf16.msra.mxu0 0
    %1039 = vmatprep.subr.bf16.mxu0 0
    %1040 = vmatpush2.bf16.msra.mxu0 0
    %1041 = vmatprep.subr.bf16.mxu0 0
    %1042 = vmatpush2.bf16.msra.mxu0 0
    %1043 = vmatprep.subr.bf16.mxu0 0
    %1044 = vmatpush2.bf16.msra.mxu0 0
    %1045 = vmatprep.mubr.bf16.mxu0 0
    %1046 = vmatmul.mubr.bf16.gmra.mxu0 %v1011
    %v1047 = vpop.f32.mrf.mxu0
    %v1048 = vadd.f32 %v99, %v1047
    %v1049 = vpop.f32.mrf.mxu0
    %v1050 = vpop.f32.mrf.mxu0
    %v1051 = vpop.f32.mrf.mxu0
    %1052 = vdwg.mxu0
    %1054 = vrot.lane.b32.xlu0 %v1048, 14
    %v1055 = vpop.permute.xlu0 %1054
    %vm1057 = vcmask 130160
    %1058 = vst.msk [vmem:[#allocation8] sm:$0xff] %vm1057, %v1055
    %1060 = vrot.lane.b32.xlu0 %v1005, 32
    %v1061 = vpop.permute.xlu0 %1060
    %1063 = vst.msk [vmem:[#allocation9] sm:$0xff] %vm210, %v1061
    // Predicated region
    $region46: #{tpu_custom_call.1} parent=1 // pred_check
      _
    $region47: #{tpu_custom_call.1} parent=1 // pred_check_branch
      %1065 = sbr.rel (0) target = $region49
    $region48: #{tpu_custom_call.1} parent=1 // pred_region
      %s1067 = ssub.s32 128, 128
      %1068 = vsyncadd [#allocation4], %s1067
      %s1070 = sshll.u32 [#allocation8], 4
      %s1071 = int_to_ptr.vmem [resolvable:$true] %s1070
      %1073 = dma.vmem_to_hbm [thread:$0]  %s1071, 128, %s8, [#allocation4]
    $region49: #{tpu_custom_call.1} parent=1 // pred_fallthru
      _
    // Predicated region
    $region50: #{tpu_custom_call.1} parent=1 // pred_check
      _
    $region51: #{tpu_custom_call.1} parent=1 // pred_check_branch
      %1075 = sbr.rel (0) target = $region53
    $region52: #{tpu_custom_call.1} parent=1 // pred_region
      %s1077 = ssub.s32 128, 128
      %1078 = vsyncadd [#allocation10], %s1077
      %s1080 = sshll.u32 [#allocation9], 4
      %s1081 = int_to_ptr.vmem [resolvable:$true] %s1080
      %1083 = dma.vmem_to_hbm [thread:$0]  %s1081, 128, %s9, [#allocation10]
    $region53: #{tpu_custom_call.1} parent=1 // pred_fallthru
      _
    // Predicated region
    $region54: #{tpu_custom_call.1} parent=1 // pred_check
      _
    $region55: #{tpu_custom_call.1} parent=1 // pred_check_branch
      %1085 = sbr.rel (0) target = $region57
    $region56: #{tpu_custom_call.1} parent=1 // pred_region
      %1086 = dma.done [#allocation4], 128
    $region57: #{tpu_custom_call.1} parent=1 // pred_fallthru
      _
    // Predicated region
    $region58: #{tpu_custom_call.1} parent=1 // pred_check
      _
    $region59: #{tpu_custom_call.1} parent=1 // pred_check_branch
      %1088 = sbr.rel (0) target = $region61
    $region60: #{tpu_custom_call.1} parent=1 // pred_region
      %1089 = dma.done [#allocation10], 128
    $region61: #{tpu_custom_call.1} parent=1 // pred_fallthru
      _
    %1090 = vsyncpa [#allocation3], 1
    %1091 = vsyncpa [#allocation6], 1
    %1092 = vsyncpa [#allocation4], 1
    %1093 = vsyncpa [#allocation10], 1

</llo_original>
